<compile_context>
chip_gen: v5e
topology: v5e:2x2
jax: 0.10.0
libtpu: 0.0.40
codegen_flags: <defaults>
</compile_context>

<pallas_src>
import functools
import math

import jax
import jax.numpy as jnp
from jax.experimental import pallas as pl
from jax.experimental.pallas import tpu as pltpu

# MXU operand dtype.  bf16 (cast in-kernel, f32 accumulation) per the perf
# review; set to jnp.float32 if a strict comparison against an f32 PyTorch
# reference is required (irrelevant for speed at these dispatch-bound shapes).
MXU_COMPUTE_DTYPE = jnp.bfloat16


# ----------------------------------------------------------------------------
# helpers
# ----------------------------------------------------------------------------
def _round_up(x, m):
    return ((x + m - 1) // m) * m


def _pad_2d(a, rows, cols):
    r, c = a.shape
    if r == rows and c == cols:
        return a
    return jnp.pad(a, ((0, rows - r), (0, cols - c)))


# ----------------------------------------------------------------------------
# Fused tiled matmul: (M, K) @ (K, N), operands cast to MXU_COMPUTE_DTYPE
# inside the kernel, f32 accumulation, optional fused epilogue:
#   "none"           : plain matmul
#   "bn_relu_cols"   : BatchNorm over the M (row) axis per output column + ReLU
#                      (Linear -> BatchNorm1d -> ReLU, batch rows in one tile)
#   "bias_tanh_rows" : per-row bias + tanh (final ConvTranspose2d -> Tanh)
# ----------------------------------------------------------------------------
def _mm_kernel(*refs, epilogue, inv_rows, eps):
    if epilogue == "bn_relu_cols":
        x_ref, w_ref, g_ref, b_ref, o_ref, acc_ref = refs
    elif epilogue == "bias_tanh_rows":
        x_ref, w_ref, b_ref, o_ref, acc_ref = refs
    else:
        x_ref, w_ref, o_ref, acc_ref = refs

    @pl.when(pl.program_id(2) == 0)
    def _():
        acc_ref[...] = jnp.zeros_like(acc_ref)

    acc_ref[...] += jnp.dot(x_ref[...].astype(MXU_COMPUTE_DTYPE),
                            w_ref[...].astype(MXU_COMPUTE_DTYPE),
                            preferred_element_type=jnp.float32)

    @pl.when(pl.program_id(2) == pl.num_programs(2) - 1)
    def _():
        acc = acc_ref[...]
        if epilogue == "bn_relu_cols":
            # biased batch variance via E[x^2]-E[x]^2 (f32; adequate here).
            mean = jnp.sum(acc, axis=0, keepdims=True) * inv_rows
            var = jnp.maximum(
                jnp.sum(acc * acc, axis=0, keepdims=True) * inv_rows
                - mean * mean, 0.0)
            y = (acc - mean) * (jax.lax.rsqrt(var + eps) * g_ref[...]) + b_ref[...]
            acc = jnp.maximum(y, 0.0)
        elif epilogue == "bias_tanh_rows":
            acc = jnp.tanh(acc + b_ref[...])
        o_ref[...] = acc.astype(o_ref.dtype)


def matmul_fused(x, w, *, epilogue="none", gamma=None, beta=None,
                 bias_rows=None, eps=1e-5,
                 max_tm=512, max_tn=1024, max_tk=512):
    M, K = x.shape
    K2, N = w.shape
    assert K == K2

    # Full-dim blocks are always legal, so a dim that fits one block is never
    # padded -- in particular K (= latent_dim or 9*Cin here) is never rounded
    # up to 128 (the old version padded/DMA'd 4-16x extra along K).
    tm = M if M <= max_tm else max_tm
    tk = K if K <= max_tk else max_tk
    tn = N if N <= max_tn else max_tn
    Mp, Kp, Np = _round_up(M, tm), _round_up(K, tk), _round_up(N, tn)

    xp = _pad_2d(x.astype(jnp.float32), Mp, Kp)
    wp = _pad_2d(w.astype(jnp.float32), Kp, Np)

    in_specs = [pl.BlockSpec((tm, tk), lambda i, j, k: (i, k)),
                pl.BlockSpec((tk, tn), lambda i, j, k: (k, j))]
    args = [xp, wp]
    inv_rows = 1.0
    if epilogue == "bn_relu_cols":
        # Per-column stats over rows: the full (unpadded) M axis must be one
        # block.  True here (M = batch = 2).
        assert M <= max_tm and Mp == M
        inv_rows = 1.0 / M
        in_specs += [pl.BlockSpec((1, tn), lambda i, j, k: (0, j)),
                     pl.BlockSpec((1, tn), lambda i, j, k: (0, j))]
        args += [_pad_2d(gamma.reshape(1, N).astype(jnp.float32), 1, Np),
                 _pad_2d(beta.reshape(1, N).astype(jnp.float32), 1, Np)]
    elif epilogue == "bias_tanh_rows":
        in_specs += [pl.BlockSpec((tm, 1), lambda i, j, k: (i, 0))]
        args += [_pad_2d(bias_rows.reshape(M, 1).astype(jnp.float32), Mp, 1)]

    out = pl.pallas_call(
        functools.partial(_mm_kernel, epilogue=epilogue,
                          inv_rows=inv_rows, eps=eps),
        out_shape=jax.ShapeDtypeStruct((Mp, Np), jnp.float32),
        grid=(Mp // tm, Np // tn, Kp // tk),
        in_specs=in_specs,
        out_specs=pl.BlockSpec((tm, tn), lambda i, j, k: (i, j)),
        scratch_shapes=[pltpu.VMEM((tm, tn), jnp.float32)],
        compiler_params=pltpu.CompilerParams(
            dimension_semantics=("parallel", "parallel", "arbitrary"),
            vmem_limit_bytes=32 * 1024 * 1024),
    )(*args)
    return out[:M, :N]


# ----------------------------------------------------------------------------
# Lane-dense, single-pass BatchNorm2d(+ReLU) on channel-major data.
# Stats are per channel over the N*H*W lane axis; one read, one write.
# ----------------------------------------------------------------------------
def _bn_relu_rows_kernel(x_ref, g_ref, b_ref, o_ref, *, inv_m, eps):
    x = x_ref[...]
    mean = jnp.sum(x, axis=1, keepdims=True) * inv_m
    var = jnp.maximum(jnp.sum(x * x, axis=1, keepdims=True) * inv_m
                      - mean * mean, 0.0)          # biased batch variance
    scale = jax.lax.rsqrt(var + eps) * g_ref[...]
    o_ref[...] = jnp.maximum((x - mean) * scale + b_ref[...], 0.0)


def bn_relu_channel(x_cnhw, gamma, beta, eps=1e-5):
    """BatchNorm2d(track_running_stats=False) + ReLU on (C, N, H, W) data.

    The whole (C, N*H*W) slab is one VMEM block (largest slab here is
    16 x 128 / 8 x 512 f32, a few tens of KiB); lanes carry the large spatial
    axis, so loads/stores are unmasked full-lane vectors.
    """
    C, N, H, W = x_cnhw.shape
    M = N * H * W
    x2 = x_cnhw.reshape(C, M).astype(jnp.float32)
    out = pl.pallas_call(
        functools.partial(_bn_relu_rows_kernel, inv_m=1.0 / M, eps=eps),
        out_shape=jax.ShapeDtypeStruct((C, M), jnp.float32),
        grid=(1,),
        in_specs=[pl.BlockSpec((C, M), lambda i: (0, 0)),
                  pl.BlockSpec((C, 1), lambda i: (0, 0)),
                  pl.BlockSpec((C, 1), lambda i: (0, 0))],
        out_specs=pl.BlockSpec((C, M), lambda i: (0, 0)),
        compiler_params=pltpu.CompilerParams(
            dimension_semantics=("arbitrary",)),
    )(x2, gamma.reshape(C, 1).astype(jnp.float32),
      beta.reshape(C, 1).astype(jnp.float32))
    return out.reshape(C, N, H, W)


# ----------------------------------------------------------------------------
# ConvTranspose2d(k=5, s=2, p=2, op=1) via stride-phase decomposition:
# one lane-dense MXU matmul + an XLA phase-interleave reshape/transpose.
# ----------------------------------------------------------------------------
_TAPS = (-1, 0, 1)   # input displacements covering ceil(K/s) = 3 taps


def _phase_weight(W, stride=2, padding=2):
    """Rearrange torch ConvTranspose2d weight (Cin, Cout, K, K) into the
    stride-phase matmul weight (stride^2*Cout, 9*Cin).

    Row (r*stride + c)*Cout + co, column t*Cin + ci (t = tap (dh, dw)) holds
    W[ci, co, kh, kw] with kh = r + padding - stride*dh (likewise kw), or 0
    when that kernel tap does not exist for the phase."""
    Cin, Cout, K, _ = W.shape
    zero = jnp.zeros((Cout, Cin), W.dtype)
    row_blocks = []
    for r in range(stride):
        for c in range(stride):
            col_blocks = []
            for dh in _TAPS:
                kh = r + padding - stride * dh
                for dw in _TAPS:
                    kw = c + padding - stride * dw
                    if 0 <= kh < K and 0 <= kw < K:
                        col_blocks.append(W[:, :, kh, kw].T)       # (Cout, Cin)
                    else:
                        col_blocks.append(zero)
            row_blocks.append(jnp.concatenate(col_blocks, axis=1))  # (Cout,9Cin)
    return jnp.concatenate(row_blocks, axis=0)                      # (4Cout,9Cin)


def _patches9(x_cnhw):
    """3x3-neighbourhood patches of channel-major data.

    Returns (9*Cin, N*H*W) with row t*Cin + ci = x[ci, n, h+dh, w+dw]
    (zero outside), t enumerating (dh, dw) in the same order as _phase_weight."""
    Cin, N, H, W = x_cnhw.shape
    xp = jnp.pad(x_cnhw, ((0, 0), (0, 0), (1, 1), (1, 1)))
    pieces = [xp[:, :, 1 + dh:1 + dh + H, 1 + dw:1 + dw + W]
              for dh in _TAPS for dw in _TAPS]
    return jnp.concatenate(pieces, axis=0).reshape(9 * Cin, N * H * W)


def conv_transpose2d_phase(x_cnhw, W, bias=None, tanh=False,
                           stride=2, padding=2, output_padding=1):
    """x_cnhw: (Cin, N, H, W) channel-major; W: torch layout (Cin, Cout, K, K).
    Optional fused per-channel bias + tanh epilogue (final layer).
    Returns (Cout, N, 2H, 2W)."""
    Cin, N, H, Wd = x_cnhw.shape
    Cin2, Cout, K, K2 = W.shape
    assert Cin == Cin2 and K == K2 == 5
    assert stride == 2 and padding == 2 and output_padding == 1
    OH, OW = 2 * H, 2 * Wd                      # (H-1)*2 - 2*2 + 5 + 1

    wp = _phase_weight(W, stride, padding)      # (4*Cout, 9*Cin)
    patches = _patches9(x_cnhw)                 # (9*Cin, N*H*W), lanes = N*H*W
    if tanh:
        rows = matmul_fused(wp, patches, epilogue="bias_tanh_rows",
                            bias_rows=jnp.tile(bias, stride * stride))
    else:
        rows = matmul_fused(wp, patches)        # (4*Cout, N*H*W)

    # Interleave phases: out[co, n, 2h+r, 2w+c] = rows[(2r+c)*Cout+co, n*H*W+..]
    y = rows.reshape(stride, stride, Cout, N, H, Wd)
    y = y.transpose(2, 3, 4, 0, 5, 1)           # (Cout, N, H, r, W, c)
    return y.reshape(Cout, N, OH, OW)


# ----------------------------------------------------------------------------
# Parameter init (deterministic, mirrors the PyTorch __init__ shapes/init).
# b0/b1/b2 are omitted: zero-initialised in the module and mathematically
# cancelled by the batch-stat BatchNorm that follows each of those layers.
# ----------------------------------------------------------------------------
def init_params(key, latent_dim, hidden_dim):
    keys = jax.random.split(key, 4)
    h = hidden_dim
    lin_out = 4 * 4 * 4 * h

    bound0 = math.sqrt(6.0 / (latent_dim + lin_out))        # xavier_uniform
    w0 = jax.random.uniform(keys[0], (latent_dim, lin_out), jnp.float32,
                            -bound0, bound0)

    def convt_w(k, cin, cout, ksz=5):
        fan_in = cout * ksz * ksz                            # torch kaiming_uniform
        bound = math.sqrt(2.0) * math.sqrt(3.0 / fan_in)
        return jax.random.uniform(k, (cin, cout, ksz, ksz), jnp.float32,
                                  -bound, bound)

    return dict(
        w0=w0,
        g_bn0=jnp.ones((lin_out,), jnp.float32),
        b_bn0=jnp.zeros((lin_out,), jnp.float32),
        w1=convt_w(keys[1], 4 * h, 2 * h),
        g_bn1=jnp.ones((2 * h,), jnp.float32),
        b_bn1=jnp.zeros((2 * h,), jnp.float32),
        w2=convt_w(keys[2], 2 * h, h),
        g_bn2=jnp.ones((h,), jnp.float32),
        b_bn2=jnp.zeros((h,), jnp.float32),
        w3=convt_w(keys[3], h, 3),
        b3=jnp.zeros((3,), jnp.float32),
    )


# ----------------------------------------------------------------------------
# Full forward pass:  net(noise).view(B, *shape)
# ----------------------------------------------------------------------------
def generator_forward(noise, params, hidden_dim, out_shape=(3, 32, 32)):
    B = noise.shape[0]
    h = hidden_dim

    # Linear -> BatchNorm1d -> ReLU, fused into one matmul kernel.
    x = matmul_fused(noise, params["w0"], epilogue="bn_relu_cols",
                     gamma=params["g_bn0"], beta=params["b_bn0"])    # (B, 256h)

    # View((4h, 4, 4)) in NCHW, then go channel-major (C, N, H, W) so the
    # conv/BN path keeps the large N*H*W axis in lanes.
    x = x.reshape(B, 4 * h, 4, 4).transpose(1, 0, 2, 3)              # (4h,B,4,4)

    # ConvTranspose2d(4h->2h) -> BatchNorm2d -> ReLU
    x = conv_transpose2d_phase(x, params["w1"])                      # (2h,B,8,8)
    x = bn_relu_channel(x, params["g_bn1"], params["b_bn1"])

    # ConvTranspose2d(2h->h) -> BatchNorm2d -> ReLU
    x = conv_transpose2d_phase(x, params["w2"])                      # (h,B,16,16)
    x = bn_relu_channel(x, params["g_bn2"], params["b_bn2"])

    # ConvTranspose2d(h->3) with fused per-channel bias + Tanh
    x = conv_transpose2d_phase(x, params["w3"], bias=params["b3"],
                               tanh=True)                            # (3,B,32,32)

    out = x.transpose(1, 0, 2, 3)                                    # (B,3,32,32)
    return out.reshape(B, *out_shape)


# ----------------------------------------------------------------------------
# Pure-XLA references (mirror the kernel's MXU precision) for self-checks.
# ----------------------------------------------------------------------------
def _ref_conv_transpose(x_nchw, W, s=2, p=2, op=1):
    """ConvTranspose2d via the canonical lhs-dilated convolution."""
    K = W.shape[-1]
    Wf = jnp.transpose(W, (1, 0, 2, 3))[:, :, ::-1, ::-1]            # (Cout,Cin,K,K)
    return jax.lax.conv_general_dilated(
        x_nchw.astype(MXU_COMPUTE_DTYPE), Wf.astype(MXU_COMPUTE_DTYPE),
        window_strides=(1, 1),
        padding=((K - 1 - p, K - 1 - p + op), (K - 1 - p, K - 1 - p + op)),
        lhs_dilation=(s, s),
        dimension_numbers=("NCHW", "OIHW", "NCHW"),
        preferred_element_type=jnp.float32)


def reference_forward(noise, params, hidden_dim, eps=1e-5):
    B = noise.shape[0]
    h = hidden_dim

    def bn(x, g, b, axes):
        mean = jnp.mean(x, axes, keepdims=True)
        var = jnp.maximum(jnp.mean(x * x, axes, keepdims=True) - mean * mean, 0.0)
        return (x - mean) * jax.lax.rsqrt(var + eps) * g + b

    x = jnp.dot(noise.astype(MXU_COMPUTE_DTYPE),
                params["w0"].astype(MXU_COMPUTE_DTYPE),
                preferred_element_type=jnp.float32)
    x = jnp.maximum(bn(x, params["g_bn0"][None, :], params["b_bn0"][None, :],
                       (0,)), 0.0)
    x = x.reshape(B, 4 * h, 4, 4)
    x = jnp.maximum(bn(_ref_conv_transpose(x, params["w1"]),
                       params["g_bn1"].reshape(1, -1, 1, 1),
                       params["b_bn1"].reshape(1, -1, 1, 1), (0, 2, 3)), 0.0)
    x = jnp.maximum(bn(_ref_conv_transpose(x, params["w2"]),
                       params["g_bn2"].reshape(1, -1, 1, 1),
                       params["b_bn2"].reshape(1, -1, 1, 1), (0, 2, 3)), 0.0)
    x = jnp.tanh(_ref_conv_transpose(x, params["w3"])
                 + params["b3"].reshape(1, -1, 1, 1))
    return x


if __name__ == "__main__":
    B = 2
    hidden_dim = 8
    latent_dim = 32
    out_shape = (3, 32, 32)        # 32x32 fixed by the 4 -> 8 -> 16 -> 32 stack

    key = jax.random.PRNGKey(0)
    pkey, nkey, akey = jax.random.split(key, 3)
    params = init_params(pkey, latent_dim, hidden_dim)

    # Perturb the affine parameters (ones/zeros at init) so the numerical
    # checks below also exercise the BN affine and final-bias code paths.
    aff_keys = jax.random.split(akey, 7)
    for i, name in enumerate(["g_bn0", "b_bn0", "g_bn1", "b_bn1",
                              "g_bn2", "b_bn2", "b3"]):
        scale = 0.5 if name.startswith("g") else 0.3
        params[name] = params[name] + scale * jax.random.normal(
            aff_keys[i], params[name].shape, jnp.float32)

    # TODO(synk): the Noise module's torch.distributions Normal(0,1) sampling
    # is replaced by an explicit jax.random.normal latent passed in as `noise`.
    noise = jax.random.normal(nkey, (B, latent_dim), jnp.float32)

    fwd = jax.jit(functools.partial(generator_forward,
                                    hidden_dim=hidden_dim,
                                    out_shape=out_shape))
    out = jax.block_until_ready(fwd(noise, params))
    assert out.shape == (B, *out_shape), out.shape
    assert bool(jnp.all(jnp.isfinite(out)))
    assert bool(jnp.all(jnp.abs(out) <= 1.0 + 1e-5))   # tanh output range

    # Unit check: stride-phase ConvTranspose2d vs the canonical lhs-dilated
    # convolution (identical bf16-rounded operands -> tight tolerance).
    ck = jax.random.split(key, 2)
    xt = jax.random.normal(ck[0], (2, 16, 8, 8), jnp.float32)        # NCHW
    wt = 0.1 * jax.random.normal(ck[1], (16, 8, 5, 5), jnp.float32)
    mine = jax.jit(lambda a, b: conv_transpose2d_phase(
        a.transpose(1, 0, 2, 3), b).transpose(1, 0, 2, 3))(xt, wt)
    ref_c = jax.jit(_ref_conv_transpose)(xt, wt)
    err_c = float(jnp.max(jnp.abs(mine - ref_c)))
    assert err_c < 2e-3, f"conv-transpose phase decomposition mismatch: {err_c}"

    # End-to-end structural check against a pure-XLA reference mirroring the
    # kernel math (bf16 operands, f32 accumulation, biased batch variance).
    # Tolerance is loose because bf16 re-rounding of slightly different f32
    # activations at each layer diverges the two pipelines by ~1e-2.
    ref = jax.jit(functools.partial(reference_forward,
                                    hidden_dim=hidden_dim))(noise, params)
    rel = float(jnp.linalg.norm(out - ref) / jnp.linalg.norm(ref))
    assert rel < 0.08, f"forward mismatch vs reference: rel L2 = {rel}"

    print("KERNEL_OK")
</pallas_src>

<mosaic_0001>
module attributes {stable_mosaic.version = 11 : i64} {
  func.func @_mm_kernel(%arg0: i32, %arg1: i32, %arg2: i32, %arg3: memref<2x32xf32, #tpu.memory_space<vmem>>, %arg4: memref<32x512xf32, #tpu.memory_space<vmem>>, %arg5: memref<1x512xf32, #tpu.memory_space<vmem>>, %arg6: memref<1x512xf32, #tpu.memory_space<vmem>>, %arg7: memref<2x512xf32, #tpu.memory_space<vmem>>, %arg8: memref<2x512xf32, #tpu.memory_space<vmem>>) attributes {dimension_semantics = [#tpu.dimension_semantics<parallel>, #tpu.dimension_semantics<parallel>, #tpu.dimension_semantics<arbitrary>], iteration_bounds = array<i64: 1, 1, 1>, scalar_prefetch = 0 : i64, scratch_operands = 1 : i64, tpu.core_type = #tpu.core_type<tc>, window_params = [{transform_indices = @transform_0, window_bounds = array<i64: 2, 32>}, {transform_indices = @transform_1, window_bounds = array<i64: 32, 512>}, {transform_indices = @transform_2, window_bounds = array<i64: 1, 512>}, {transform_indices = @transform_3, window_bounds = array<i64: 1, 512>}, {transform_indices = @transform_4, window_bounds = array<i64: 2, 512>}]} {
    %c0_i32 = arith.constant 0 : i32
    %0 = arith.cmpi eq, %arg2, %c0_i32 : i32
    %1 = arith.extui %0 : i1 to i32
    %c0_i32_0 = arith.constant 0 : i32
    %2 = arith.cmpi ne, %1, %c0_i32_0 : i32
    scf.if %2 {
      %cst_10 = arith.constant 0.000000e+00 : f32
      %14 = vector.broadcast %cst_10 : f32 to vector<2x512xf32>
      %c0_11 = arith.constant 0 : index
      %c0_12 = arith.constant 0 : index
      %15 = vector.load %arg8[%c0_11, %c0_12] : memref<2x512xf32, #tpu.memory_space<vmem>>, vector<2x512xf32>
      tpu.vector_store %arg8[%c0_11, %c0_12], %14 {strides = array<i32>} : memref<2x512xf32, #tpu.memory_space<vmem>>, vector<2x512xf32>,
    } else {
    }
    %c0 = arith.constant 0 : index
    %c0_1 = arith.constant 0 : index
    %3 = vector.load %arg8[%c0, %c0_1] : memref<2x512xf32, #tpu.memory_space<vmem>>, vector<2x512xf32>
    %c0_2 = arith.constant 0 : index
    %c0_3 = arith.constant 0 : index
    %4 = vector.load %arg3[%c0_2, %c0_3] : memref<2x32xf32, #tpu.memory_space<vmem>>, vector<2x32xf32>
    %5 = arith.truncf %4 : vector<2x32xf32> to vector<2x32xbf16>
    %c0_4 = arith.constant 0 : index
    %c0_5 = arith.constant 0 : index
    %6 = vector.load %arg4[%c0_4, %c0_5] : memref<32x512xf32, #tpu.memory_space<vmem>>, vector<32x512xf32>
    %7 = arith.truncf %6 : vector<32x512xf32> to vector<32x512xbf16>
    %cst = arith.constant dense<0.000000e+00> : vector<2x512xf32>
    %8 = tpu.matmul %5, %7, %cst {dimension_numbers = #tpu.dot_dimension_numbers<[1], [0], [0], [1], [0, 0, 1, 1], [], []>} : vector<2x32xbf16>, vector<32x512xbf16>, vector<2x512xf32> -> vector<2x512xf32>
    %9 = arith.addf %3, %8 : vector<2x512xf32>
    %c0_6 = arith.constant 0 : index
    %c0_7 = arith.constant 0 : index
    %10 = vector.load %arg8[%c0_6, %c0_7] : memref<2x512xf32, #tpu.memory_space<vmem>>, vector<2x512xf32>
    tpu.vector_store %arg8[%c0_6, %c0_7], %9 {strides = array<i32>} : memref<2x512xf32, #tpu.memory_space<vmem>>, vector<2x512xf32>,
    %c0_i32_8 = arith.constant 0 : i32
    %11 = arith.cmpi eq, %arg2, %c0_i32_8 : i32
    %12 = arith.extui %11 : i1 to i32
    %c0_i32_9 = arith.constant 0 : i32
    %13 = arith.cmpi ne, %12, %c0_i32_9 : i32
    scf.if %13 {
      %c0_10 = arith.constant 0 : index
      %c0_11 = arith.constant 0 : index
      %14 = vector.load %arg8[%c0_10, %c0_11] : memref<2x512xf32, #tpu.memory_space<vmem>>, vector<2x512xf32>
      %cst_12 = arith.constant dense<0.000000e+00> : vector<512xf32>
      %15 = vector.multi_reduction <add>, %14, %cst_12 [0] : vector<2x512xf32> to vector<512xf32>
      %16 = vector.shape_cast %15 : vector<512xf32> to vector<1x512xf32>
      %cst_13 = arith.constant 5.000000e-01 : f32
      %17 = vector.broadcast %cst_13 : f32 to vector<1x512xf32>
      %18 = arith.mulf %16, %17 : vector<1x512xf32>
      %19 = arith.mulf %14, %14 : vector<2x512xf32>
      %cst_14 = arith.constant dense<0.000000e+00> : vector<512xf32>
      %20 = vector.multi_reduction <add>, %19, %cst_14 [0] : vector<2x512xf32> to vector<512xf32>
      %21 = vector.shape_cast %20 : vector<512xf32> to vector<1x512xf32>
      %cst_15 = arith.constant 5.000000e-01 : f32
      %22 = vector.broadcast %cst_15 : f32 to vector<1x512xf32>
      %23 = arith.mulf %21, %22 : vector<1x512xf32>
      %24 = arith.mulf %18, %18 : vector<1x512xf32>
      %25 = arith.subf %23, %24 : vector<1x512xf32>
      %cst_16 = arith.constant 0.000000e+00 : f32
      %26 = vector.broadcast %cst_16 : f32 to vector<1x512xf32>
      %27 = arith.maximumf %25, %26 : vector<1x512xf32>
      %28 = vector.broadcast %18 : vector<1x512xf32> to vector<2x512xf32>
      %29 = arith.subf %14, %28 : vector<2x512xf32>
      %cst_17 = arith.constant 9.99999974E-6 : f32
      %30 = vector.broadcast %cst_17 : f32 to vector<1x512xf32>
      %31 = arith.addf %27, %30 : vector<1x512xf32>
      %32 = math.rsqrt %31 : vector<1x512xf32>
      %c0_18 = arith.constant 0 : index
      %c0_19 = arith.constant 0 : index
      %33 = vector.load %arg5[%c0_18, %c0_19] : memref<1x512xf32, #tpu.memory_space<vmem>>, vector<1x512xf32>
      %34 = arith.mulf %32, %33 : vector<1x512xf32>
      %35 = vector.broadcast %34 : vector<1x512xf32> to vector<2x512xf32>
      %36 = arith.mulf %29, %35 : vector<2x512xf32>
      %c0_20 = arith.constant 0 : index
      %c0_21 = arith.constant 0 : index
      %37 = vector.load %arg6[%c0_20, %c0_21] : memref<1x512xf32, #tpu.memory_space<vmem>>, vector<1x512xf32>
      %38 = vector.broadcast %37 : vector<1x512xf32> to vector<2x512xf32>
      %39 = arith.addf %36, %38 : vector<2x512xf32>
      %cst_22 = arith.constant 0.000000e+00 : f32
      %40 = vector.broadcast %cst_22 : f32 to vector<2x512xf32>
      %41 = arith.maximumf %39, %40 : vector<2x512xf32>
      %c0_23 = arith.constant 0 : index
      %c0_24 = arith.constant 0 : index
      %42 = vector.load %arg7[%c0_23, %c0_24] : memref<2x512xf32, #tpu.memory_space<vmem>>, vector<2x512xf32>
      tpu.vector_store %arg7[%c0_23, %c0_24], %41 {strides = array<i32>} : memref<2x512xf32, #tpu.memory_space<vmem>>, vector<2x512xf32>,
    } else {
    }
    return
  }
  func.func @transform_0(%arg0: i32, %arg1: i32, %arg2: i32) -> (i32, i32) {
    %c0_i32 = arith.constant 0 : i32
    return %arg0, %arg2 : i32, i32
  }
  func.func @transform_1(%arg0: i32, %arg1: i32, %arg2: i32) -> (i32, i32) {
    %c0_i32 = arith.constant 0 : i32
    return %arg2, %arg1 : i32, i32
  }
  func.func @transform_2(%arg0: i32, %arg1: i32, %arg2: i32) -> (i32, i32) {
    %c0_i32 = arith.constant 0 : i32
    %c0_i32_0 = arith.constant 0 : i32
    return %c0_i32, %arg1 : i32, i32
  }
  func.func @transform_3(%arg0: i32, %arg1: i32, %arg2: i32) -> (i32, i32) {
    %c0_i32 = arith.constant 0 : i32
    %c0_i32_0 = arith.constant 0 : i32
    return %c0_i32, %arg1 : i32, i32
  }
  func.func @transform_4(%arg0: i32, %arg1: i32, %arg2: i32) -> (i32, i32) {
    %c0_i32 = arith.constant 0 : i32
    return %arg0, %arg1 : i32, i32
  }
}

module attributes {stable_mosaic.version = 11 : i64} {
  func.func @_mm_kernel(%arg0: i32, %arg1: i32, %arg2: i32, %arg3: memref<64x288xf32, #tpu.memory_space<vmem>>, %arg4: memref<288x32xf32, #tpu.memory_space<vmem>>, %arg5: memref<64x32xf32, #tpu.memory_space<vmem>>, %arg6: memref<64x32xf32, #tpu.memory_space<vmem>>) attributes {dimension_semantics = [#tpu.dimension_semantics<parallel>, #tpu.dimension_semantics<parallel>, #tpu.dimension_semantics<arbitrary>], iteration_bounds = array<i64: 1, 1, 1>, scalar_prefetch = 0 : i64, scratch_operands = 1 : i64, tpu.core_type = #tpu.core_type<tc>, window_params = [{transform_indices = @transform_0, window_bounds = array<i64: 64, 288>}, {transform_indices = @transform_1, window_bounds = array<i64: 288, 32>}, {transform_indices = @transform_2, window_bounds = array<i64: 64, 32>}]} {
    %c0_i32 = arith.constant 0 : i32
    %0 = arith.cmpi eq, %arg2, %c0_i32 : i32
    %1 = arith.extui %0 : i1 to i32
    %c0_i32_0 = arith.constant 0 : i32
    %2 = arith.cmpi ne, %1, %c0_i32_0 : i32
    scf.if %2 {
      %cst_10 = arith.constant 0.000000e+00 : f32
      %14 = vector.broadcast %cst_10 : f32 to vector<64x32xf32>
      %c0_11 = arith.constant 0 : index
      %c0_12 = arith.constant 0 : index
      %15 = vector.load %arg6[%c0_11, %c0_12] : memref<64x32xf32, #tpu.memory_space<vmem>>, vector<64x32xf32>
      tpu.vector_store %arg6[%c0_11, %c0_12], %14 {strides = array<i32>} : memref<64x32xf32, #tpu.memory_space<vmem>>, vector<64x32xf32>,
    } else {
    }
    %c0 = arith.constant 0 : index
    %c0_1 = arith.constant 0 : index
    %3 = vector.load %arg6[%c0, %c0_1] : memref<64x32xf32, #tpu.memory_space<vmem>>, vector<64x32xf32>
    %c0_2 = arith.constant 0 : index
    %c0_3 = arith.constant 0 : index
    %4 = vector.load %arg3[%c0_2, %c0_3] : memref<64x288xf32, #tpu.memory_space<vmem>>, vector<64x288xf32>
    %5 = arith.truncf %4 : vector<64x288xf32> to vector<64x288xbf16>
    %c0_4 = arith.constant 0 : index
    %c0_5 = arith.constant 0 : index
    %6 = vector.load %arg4[%c0_4, %c0_5] : memref<288x32xf32, #tpu.memory_space<vmem>>, vector<288x32xf32>
    %7 = arith.truncf %6 : vector<288x32xf32> to vector<288x32xbf16>
    %cst = arith.constant dense<0.000000e+00> : vector<64x32xf32>
    %8 = tpu.matmul %5, %7, %cst {dimension_numbers = #tpu.dot_dimension_numbers<[1], [0], [0], [1], [0, 0, 1, 1], [], []>} : vector<64x288xbf16>, vector<288x32xbf16>, vector<64x32xf32> -> vector<64x32xf32>
    %9 = arith.addf %3, %8 : vector<64x32xf32>
    %c0_6 = arith.constant 0 : index
    %c0_7 = arith.constant 0 : index
    %10 = vector.load %arg6[%c0_6, %c0_7] : memref<64x32xf32, #tpu.memory_space<vmem>>, vector<64x32xf32>
    tpu.vector_store %arg6[%c0_6, %c0_7], %9 {strides = array<i32>} : memref<64x32xf32, #tpu.memory_space<vmem>>, vector<64x32xf32>,
    %c0_i32_8 = arith.constant 0 : i32
    %11 = arith.cmpi eq, %arg2, %c0_i32_8 : i32
    %12 = arith.extui %11 : i1 to i32
    %c0_i32_9 = arith.constant 0 : i32
    %13 = arith.cmpi ne, %12, %c0_i32_9 : i32
    scf.if %13 {
      %c0_10 = arith.constant 0 : index
      %c0_11 = arith.constant 0 : index
      %14 = vector.load %arg6[%c0_10, %c0_11] : memref<64x32xf32, #tpu.memory_space<vmem>>, vector<64x32xf32>
      %c0_12 = arith.constant 0 : index
      %c0_13 = arith.constant 0 : index
      %15 = vector.load %arg5[%c0_12, %c0_13] : memref<64x32xf32, #tpu.memory_space<vmem>>, vector<64x32xf32>
      tpu.vector_store %arg5[%c0_12, %c0_13], %14 {strides = array<i32>} : memref<64x32xf32, #tpu.memory_space<vmem>>, vector<64x32xf32>,
    } else {
    }
    return
  }
  func.func @transform_0(%arg0: i32, %arg1: i32, %arg2: i32) -> (i32, i32) {
    %c0_i32 = arith.constant 0 : i32
    return %arg0, %arg2 : i32, i32
  }
  func.func @transform_1(%arg0: i32, %arg1: i32, %arg2: i32) -> (i32, i32) {
    %c0_i32 = arith.constant 0 : i32
    return %arg2, %arg1 : i32, i32
  }
  func.func @transform_2(%arg0: i32, %arg1: i32, %arg2: i32) -> (i32, i32) {
    %c0_i32 = arith.constant 0 : i32
    return %arg0, %arg1 : i32, i32
  }
}

module attributes {stable_mosaic.version = 11 : i64} {
  func.func @_bn_relu_rows_kernel(%arg0: i32, %arg1: memref<16x128xf32, #tpu.memory_space<vmem>>, %arg2: memref<16x1xf32, #tpu.memory_space<vmem>>, %arg3: memref<16x1xf32, #tpu.memory_space<vmem>>, %arg4: memref<16x128xf32, #tpu.memory_space<vmem>>) attributes {dimension_semantics = [#tpu.dimension_semantics<arbitrary>], iteration_bounds = array<i64: 1>, scalar_prefetch = 0 : i64, scratch_operands = 0 : i64, tpu.core_type = #tpu.core_type<tc>, window_params = [{pipeline_mode = #tpu.pipeline_mode<synchronous>, transform_indices = @transform_0, window_bounds = array<i64: 16, 128>}, {pipeline_mode = #tpu.pipeline_mode<synchronous>, transform_indices = @transform_1, window_bounds = array<i64: 16, 1>}, {pipeline_mode = #tpu.pipeline_mode<synchronous>, transform_indices = @transform_2, window_bounds = array<i64: 16, 1>}, {pipeline_mode = #tpu.pipeline_mode<synchronous>, transform_indices = @transform_3, window_bounds = array<i64: 16, 128>}]} {
    %c0 = arith.constant 0 : index
    %c0_0 = arith.constant 0 : index
    %0 = vector.load %arg1[%c0, %c0_0] : memref<16x128xf32, #tpu.memory_space<vmem>>, vector<16x128xf32>
    %cst = arith.constant dense<0.000000e+00> : vector<16xf32>
    %1 = vector.multi_reduction <add>, %0, %cst [1] : vector<16x128xf32> to vector<16xf32>
    %2 = vector.shape_cast %1 : vector<16xf32> to vector<16x1xf32>
    %cst_1 = arith.constant 7.812500e-03 : f32
    %3 = vector.broadcast %cst_1 : f32 to vector<16x1xf32>
    %4 = arith.mulf %2, %3 : vector<16x1xf32>
    %5 = arith.mulf %0, %0 : vector<16x128xf32>
    %cst_2 = arith.constant dense<0.000000e+00> : vector<16xf32>
    %6 = vector.multi_reduction <add>, %5, %cst_2 [1] : vector<16x128xf32> to vector<16xf32>
    %7 = vector.shape_cast %6 : vector<16xf32> to vector<16x1xf32>
    %cst_3 = arith.constant 7.812500e-03 : f32
    %8 = vector.broadcast %cst_3 : f32 to vector<16x1xf32>
    %9 = arith.mulf %7, %8 : vector<16x1xf32>
    %10 = arith.mulf %4, %4 : vector<16x1xf32>
    %11 = arith.subf %9, %10 : vector<16x1xf32>
    %cst_4 = arith.constant 0.000000e+00 : f32
    %12 = vector.broadcast %cst_4 : f32 to vector<16x1xf32>
    %13 = arith.maximumf %11, %12 : vector<16x1xf32>
    %cst_5 = arith.constant 9.99999974E-6 : f32
    %14 = vector.broadcast %cst_5 : f32 to vector<16x1xf32>
    %15 = arith.addf %13, %14 : vector<16x1xf32>
    %16 = math.rsqrt %15 : vector<16x1xf32>
    %c0_6 = arith.constant 0 : index
    %c0_7 = arith.constant 0 : index
    %17 = vector.load %arg2[%c0_6, %c0_7] : memref<16x1xf32, #tpu.memory_space<vmem>>, vector<16x1xf32>
    %18 = arith.mulf %16, %17 : vector<16x1xf32>
    %19 = vector.broadcast %4 : vector<16x1xf32> to vector<16x128xf32>
    %20 = arith.subf %0, %19 : vector<16x128xf32>
    %21 = vector.broadcast %18 : vector<16x1xf32> to vector<16x128xf32>
    %22 = arith.mulf %20, %21 : vector<16x128xf32>
    %c0_8 = arith.constant 0 : index
    %c0_9 = arith.constant 0 : index
    %23 = vector.load %arg3[%c0_8, %c0_9] : memref<16x1xf32, #tpu.memory_space<vmem>>, vector<16x1xf32>
    %24 = vector.broadcast %23 : vector<16x1xf32> to vector<16x128xf32>
    %25 = arith.addf %22, %24 : vector<16x128xf32>
    %cst_10 = arith.constant 0.000000e+00 : f32
    %26 = vector.broadcast %cst_10 : f32 to vector<16x128xf32>
    %27 = arith.maximumf %25, %26 : vector<16x128xf32>
    %c0_11 = arith.constant 0 : index
    %c0_12 = arith.constant 0 : index
    %28 = vector.load %arg4[%c0_11, %c0_12] : memref<16x128xf32, #tpu.memory_space<vmem>>, vector<16x128xf32>
    tpu.vector_store %arg4[%c0_11, %c0_12], %27 {strides = array<i32>} : memref<16x128xf32, #tpu.memory_space<vmem>>, vector<16x128xf32>,
    return
  }
  func.func @transform_0(%arg0: i32) -> (i32, i32) {
    %c0_i32 = arith.constant 0 : i32
    %c0_i32_0 = arith.constant 0 : i32
    %c0_i32_1 = arith.constant 0 : i32
    return %c0_i32, %c0_i32_0 : i32, i32
  }
  func.func @transform_1(%arg0: i32) -> (i32, i32) {
    %c0_i32 = arith.constant 0 : i32
    %c0_i32_0 = arith.constant 0 : i32
    %c0_i32_1 = arith.constant 0 : i32
    return %c0_i32, %c0_i32_0 : i32, i32
  }
  func.func @transform_2(%arg0: i32) -> (i32, i32) {
    %c0_i32 = arith.constant 0 : i32
    %c0_i32_0 = arith.constant 0 : i32
    %c0_i32_1 = arith.constant 0 : i32
    return %c0_i32, %c0_i32_0 : i32, i32
  }
  func.func @transform_3(%arg0: i32) -> (i32, i32) {
    %c0_i32 = arith.constant 0 : i32
    %c0_i32_0 = arith.constant 0 : i32
    %c0_i32_1 = arith.constant 0 : i32
    return %c0_i32, %c0_i32_0 : i32, i32
  }
}

module attributes {stable_mosaic.version = 11 : i64} {
  func.func @_mm_kernel(%arg0: i32, %arg1: i32, %arg2: i32, %arg3: memref<32x144xf32, #tpu.memory_space<vmem>>, %arg4: memref<144x128xf32, #tpu.memory_space<vmem>>, %arg5: memref<32x128xf32, #tpu.memory_space<vmem>>, %arg6: memref<32x128xf32, #tpu.memory_space<vmem>>) attributes {dimension_semantics = [#tpu.dimension_semantics<parallel>, #tpu.dimension_semantics<parallel>, #tpu.dimension_semantics<arbitrary>], iteration_bounds = array<i64: 1, 1, 1>, scalar_prefetch = 0 : i64, scratch_operands = 1 : i64, tpu.core_type = #tpu.core_type<tc>, window_params = [{transform_indices = @transform_0, window_bounds = array<i64: 32, 144>}, {transform_indices = @transform_1, window_bounds = array<i64: 144, 128>}, {transform_indices = @transform_2, window_bounds = array<i64: 32, 128>}]} {
    %c0_i32 = arith.constant 0 : i32
    %0 = arith.cmpi eq, %arg2, %c0_i32 : i32
    %1 = arith.extui %0 : i1 to i32
    %c0_i32_0 = arith.constant 0 : i32
    %2 = arith.cmpi ne, %1, %c0_i32_0 : i32
    scf.if %2 {
      %cst_10 = arith.constant 0.000000e+00 : f32
      %14 = vector.broadcast %cst_10 : f32 to vector<32x128xf32>
      %c0_11 = arith.constant 0 : index
      %c0_12 = arith.constant 0 : index
      %15 = vector.load %arg6[%c0_11, %c0_12] : memref<32x128xf32, #tpu.memory_space<vmem>>, vector<32x128xf32>
      tpu.vector_store %arg6[%c0_11, %c0_12], %14 {strides = array<i32>} : memref<32x128xf32, #tpu.memory_space<vmem>>, vector<32x128xf32>,
    } else {
    }
    %c0 = arith.constant 0 : index
    %c0_1 = arith.constant 0 : index
    %3 = vector.load %arg6[%c0, %c0_1] : memref<32x128xf32, #tpu.memory_space<vmem>>, vector<32x128xf32>
    %c0_2 = arith.constant 0 : index
    %c0_3 = arith.constant 0 : index
    %4 = vector.load %arg3[%c0_2, %c0_3] : memref<32x144xf32, #tpu.memory_space<vmem>>, vector<32x144xf32>
    %5 = arith.truncf %4 : vector<32x144xf32> to vector<32x144xbf16>
    %c0_4 = arith.constant 0 : index
    %c0_5 = arith.constant 0 : index
    %6 = vector.load %arg4[%c0_4, %c0_5] : memref<144x128xf32, #tpu.memory_space<vmem>>, vector<144x128xf32>
    %7 = arith.truncf %6 : vector<144x128xf32> to vector<144x128xbf16>
    %cst = arith.constant dense<0.000000e+00> : vector<32x128xf32>
    %8 = tpu.matmul %5, %7, %cst {dimension_numbers = #tpu.dot_dimension_numbers<[1], [0], [0], [1], [0, 0, 1, 1], [], []>} : vector<32x144xbf16>, vector<144x128xbf16>, vector<32x128xf32> -> vector<32x128xf32>
    %9 = arith.addf %3, %8 : vector<32x128xf32>
    %c0_6 = arith.constant 0 : index
    %c0_7 = arith.constant 0 : index
    %10 = vector.load %arg6[%c0_6, %c0_7] : memref<32x128xf32, #tpu.memory_space<vmem>>, vector<32x128xf32>
    tpu.vector_store %arg6[%c0_6, %c0_7], %9 {strides = array<i32>} : memref<32x128xf32, #tpu.memory_space<vmem>>, vector<32x128xf32>,
    %c0_i32_8 = arith.constant 0 : i32
    %11 = arith.cmpi eq, %arg2, %c0_i32_8 : i32
    %12 = arith.extui %11 : i1 to i32
    %c0_i32_9 = arith.constant 0 : i32
    %13 = arith.cmpi ne, %12, %c0_i32_9 : i32
    scf.if %13 {
      %c0_10 = arith.constant 0 : index
      %c0_11 = arith.constant 0 : index
      %14 = vector.load %arg6[%c0_10, %c0_11] : memref<32x128xf32, #tpu.memory_space<vmem>>, vector<32x128xf32>
      %c0_12 = arith.constant 0 : index
      %c0_13 = arith.constant 0 : index
      %15 = vector.load %arg5[%c0_12, %c0_13] : memref<32x128xf32, #tpu.memory_space<vmem>>, vector<32x128xf32>
      tpu.vector_store %arg5[%c0_12, %c0_13], %14 {strides = array<i32>} : memref<32x128xf32, #tpu.memory_space<vmem>>, vector<32x128xf32>,
    } else {
    }
    return
  }
  func.func @transform_0(%arg0: i32, %arg1: i32, %arg2: i32) -> (i32, i32) {
    %c0_i32 = arith.constant 0 : i32
    return %arg0, %arg2 : i32, i32
  }
  func.func @transform_1(%arg0: i32, %arg1: i32, %arg2: i32) -> (i32, i32) {
    %c0_i32 = arith.constant 0 : i32
    return %arg2, %arg1 : i32, i32
  }
  func.func @transform_2(%arg0: i32, %arg1: i32, %arg2: i32) -> (i32, i32) {
    %c0_i32 = arith.constant 0 : i32
    return %arg0, %arg1 : i32, i32
  }
}

module attributes {stable_mosaic.version = 11 : i64} {
  func.func @_bn_relu_rows_kernel(%arg0: i32, %arg1: memref<8x512xf32, #tpu.memory_space<vmem>>, %arg2: memref<8x1xf32, #tpu.memory_space<vmem>>, %arg3: memref<8x1xf32, #tpu.memory_space<vmem>>, %arg4: memref<8x512xf32, #tpu.memory_space<vmem>>) attributes {dimension_semantics = [#tpu.dimension_semantics<arbitrary>], iteration_bounds = array<i64: 1>, scalar_prefetch = 0 : i64, scratch_operands = 0 : i64, tpu.core_type = #tpu.core_type<tc>, window_params = [{pipeline_mode = #tpu.pipeline_mode<synchronous>, transform_indices = @transform_0, window_bounds = array<i64: 8, 512>}, {pipeline_mode = #tpu.pipeline_mode<synchronous>, transform_indices = @transform_1, window_bounds = array<i64: 8, 1>}, {pipeline_mode = #tpu.pipeline_mode<synchronous>, transform_indices = @transform_2, window_bounds = array<i64: 8, 1>}, {pipeline_mode = #tpu.pipeline_mode<synchronous>, transform_indices = @transform_3, window_bounds = array<i64: 8, 512>}]} {
    %c0 = arith.constant 0 : index
    %c0_0 = arith.constant 0 : index
    %0 = vector.load %arg1[%c0, %c0_0] : memref<8x512xf32, #tpu.memory_space<vmem>>, vector<8x512xf32>
    %cst = arith.constant dense<0.000000e+00> : vector<8xf32>
    %1 = vector.multi_reduction <add>, %0, %cst [1] : vector<8x512xf32> to vector<8xf32>
    %2 = vector.shape_cast %1 : vector<8xf32> to vector<8x1xf32>
    %cst_1 = arith.constant 0.001953125 : f32
    %3 = vector.broadcast %cst_1 : f32 to vector<8x1xf32>
    %4 = arith.mulf %2, %3 : vector<8x1xf32>
    %5 = arith.mulf %0, %0 : vector<8x512xf32>
    %cst_2 = arith.constant dense<0.000000e+00> : vector<8xf32>
    %6 = vector.multi_reduction <add>, %5, %cst_2 [1] : vector<8x512xf32> to vector<8xf32>
    %7 = vector.shape_cast %6 : vector<8xf32> to vector<8x1xf32>
    %cst_3 = arith.constant 0.001953125 : f32
    %8 = vector.broadcast %cst_3 : f32 to vector<8x1xf32>
    %9 = arith.mulf %7, %8 : vector<8x1xf32>
    %10 = arith.mulf %4, %4 : vector<8x1xf32>
    %11 = arith.subf %9, %10 : vector<8x1xf32>
    %cst_4 = arith.constant 0.000000e+00 : f32
    %12 = vector.broadcast %cst_4 : f32 to vector<8x1xf32>
    %13 = arith.maximumf %11, %12 : vector<8x1xf32>
    %cst_5 = arith.constant 9.99999974E-6 : f32
    %14 = vector.broadcast %cst_5 : f32 to vector<8x1xf32>
    %15 = arith.addf %13, %14 : vector<8x1xf32>
    %16 = math.rsqrt %15 : vector<8x1xf32>
    %c0_6 = arith.constant 0 : index
    %c0_7 = arith.constant 0 : index
    %17 = vector.load %arg2[%c0_6, %c0_7] : memref<8x1xf32, #tpu.memory_space<vmem>>, vector<8x1xf32>
    %18 = arith.mulf %16, %17 : vector<8x1xf32>
    %19 = vector.broadcast %4 : vector<8x1xf32> to vector<8x512xf32>
    %20 = arith.subf %0, %19 : vector<8x512xf32>
    %21 = vector.broadcast %18 : vector<8x1xf32> to vector<8x512xf32>
    %22 = arith.mulf %20, %21 : vector<8x512xf32>
    %c0_8 = arith.constant 0 : index
    %c0_9 = arith.constant 0 : index
    %23 = vector.load %arg3[%c0_8, %c0_9] : memref<8x1xf32, #tpu.memory_space<vmem>>, vector<8x1xf32>
    %24 = vector.broadcast %23 : vector<8x1xf32> to vector<8x512xf32>
    %25 = arith.addf %22, %24 : vector<8x512xf32>
    %cst_10 = arith.constant 0.000000e+00 : f32
    %26 = vector.broadcast %cst_10 : f32 to vector<8x512xf32>
    %27 = arith.maximumf %25, %26 : vector<8x512xf32>
    %c0_11 = arith.constant 0 : index
    %c0_12 = arith.constant 0 : index
    %28 = vector.load %arg4[%c0_11, %c0_12] : memref<8x512xf32, #tpu.memory_space<vmem>>, vector<8x512xf32>
    tpu.vector_store %arg4[%c0_11, %c0_12], %27 {strides = array<i32>} : memref<8x512xf32, #tpu.memory_space<vmem>>, vector<8x512xf32>,
    return
  }
  func.func @transform_0(%arg0: i32) -> (i32, i32) {
    %c0_i32 = arith.constant 0 : i32
    %c0_i32_0 = arith.constant 0 : i32
    %c0_i32_1 = arith.constant 0 : i32
    return %c0_i32, %c0_i32_0 : i32, i32
  }
  func.func @transform_1(%arg0: i32) -> (i32, i32) {
    %c0_i32 = arith.constant 0 : i32
    %c0_i32_0 = arith.constant 0 : i32
    %c0_i32_1 = arith.constant 0 : i32
    return %c0_i32, %c0_i32_0 : i32, i32
  }
  func.func @transform_2(%arg0: i32) -> (i32, i32) {
    %c0_i32 = arith.constant 0 : i32
    %c0_i32_0 = arith.constant 0 : i32
    %c0_i32_1 = arith.constant 0 : i32
    return %c0_i32, %c0_i32_0 : i32, i32
  }
  func.func @transform_3(%arg0: i32) -> (i32, i32) {
    %c0_i32 = arith.constant 0 : i32
    %c0_i32_0 = arith.constant 0 : i32
    %c0_i32_1 = arith.constant 0 : i32
    return %c0_i32, %c0_i32_0 : i32, i32
  }
}

module attributes {stable_mosaic.version = 11 : i64} {
  func.func @_mm_kernel(%arg0: i32, %arg1: i32, %arg2: i32, %arg3: memref<12x72xf32, #tpu.memory_space<vmem>>, %arg4: memref<72x512xf32, #tpu.memory_space<vmem>>, %arg5: memref<12x1xf32, #tpu.memory_space<vmem>>, %arg6: memref<12x512xf32, #tpu.memory_space<vmem>>, %arg7: memref<12x512xf32, #tpu.memory_space<vmem>>) attributes {dimension_semantics = [#tpu.dimension_semantics<parallel>, #tpu.dimension_semantics<parallel>, #tpu.dimension_semantics<arbitrary>], iteration_bounds = array<i64: 1, 1, 1>, scalar_prefetch = 0 : i64, scratch_operands = 1 : i64, tpu.core_type = #tpu.core_type<tc>, window_params = [{transform_indices = @transform_0, window_bounds = array<i64: 12, 72>}, {transform_indices = @transform_1, window_bounds = array<i64: 72, 512>}, {transform_indices = @transform_2, window_bounds = array<i64: 12, 1>}, {transform_indices = @transform_3, window_bounds = array<i64: 12, 512>}]} {
    %c0_i32 = arith.constant 0 : i32
    %0 = arith.cmpi eq, %arg2, %c0_i32 : i32
    %1 = arith.extui %0 : i1 to i32
    %c0_i32_0 = arith.constant 0 : i32
    %2 = arith.cmpi ne, %1, %c0_i32_0 : i32
    scf.if %2 {
      %cst_10 = arith.constant 0.000000e+00 : f32
      %14 = vector.broadcast %cst_10 : f32 to vector<12x512xf32>
      %c0_11 = arith.constant 0 : index
      %c0_12 = arith.constant 0 : index
      %15 = vector.load %arg7[%c0_11, %c0_12] : memref<12x512xf32, #tpu.memory_space<vmem>>, vector<12x512xf32>
      tpu.vector_store %arg7[%c0_11, %c0_12], %14 {strides = array<i32>} : memref<12x512xf32, #tpu.memory_space<vmem>>, vector<12x512xf32>,
    } else {
    }
    %c0 = arith.constant 0 : index
    %c0_1 = arith.constant 0 : index
    %3 = vector.load %arg7[%c0, %c0_1] : memref<12x512xf32, #tpu.memory_space<vmem>>, vector<12x512xf32>
    %c0_2 = arith.constant 0 : index
    %c0_3 = arith.constant 0 : index
    %4 = vector.load %arg3[%c0_2, %c0_3] : memref<12x72xf32, #tpu.memory_space<vmem>>, vector<12x72xf32>
    %5 = arith.truncf %4 : vector<12x72xf32> to vector<12x72xbf16>
    %c0_4 = arith.constant 0 : index
    %c0_5 = arith.constant 0 : index
    %6 = vector.load %arg4[%c0_4, %c0_5] : memref<72x512xf32, #tpu.memory_space<vmem>>, vector<72x512xf32>
    %7 = arith.truncf %6 : vector<72x512xf32> to vector<72x512xbf16>
    %cst = arith.constant dense<0.000000e+00> : vector<12x512xf32>
    %8 = tpu.matmul %5, %7, %cst {dimension_numbers = #tpu.dot_dimension_numbers<[1], [0], [0], [1], [0, 0, 1, 1], [], []>} : vector<12x72xbf16>, vector<72x512xbf16>, vector<12x512xf32> -> vector<12x512xf32>
    %9 = arith.addf %3, %8 : vector<12x512xf32>
    %c0_6 = arith.constant 0 : index
    %c0_7 = arith.constant 0 : index
    %10 = vector.load %arg7[%c0_6, %c0_7] : memref<12x512xf32, #tpu.memory_space<vmem>>, vector<12x512xf32>
    tpu.vector_store %arg7[%c0_6, %c0_7], %9 {strides = array<i32>} : memref<12x512xf32, #tpu.memory_space<vmem>>, vector<12x512xf32>,
    %c0_i32_8 = arith.constant 0 : i32
    %11 = arith.cmpi eq, %arg2, %c0_i32_8 : i32
    %12 = arith.extui %11 : i1 to i32
    %c0_i32_9 = arith.constant 0 : i32
    %13 = arith.cmpi ne, %12, %c0_i32_9 : i32
    scf.if %13 {
      %c0_10 = arith.constant 0 : index
      %c0_11 = arith.constant 0 : index
      %14 = vector.load %arg7[%c0_10, %c0_11] : memref<12x512xf32, #tpu.memory_space<vmem>>, vector<12x512xf32>
      %c0_12 = arith.constant 0 : index
      %c0_13 = arith.constant 0 : index
      %15 = vector.load %arg5[%c0_12, %c0_13] : memref<12x1xf32, #tpu.memory_space<vmem>>, vector<12x1xf32>
      %16 = vector.broadcast %15 : vector<12x1xf32> to vector<12x512xf32>
      %17 = arith.addf %14, %16 : vector<12x512xf32>
      %18 = math.tanh %17 : vector<12x512xf32>
      %c0_14 = arith.constant 0 : index
      %c0_15 = arith.constant 0 : index
      %19 = vector.load %arg6[%c0_14, %c0_15] : memref<12x512xf32, #tpu.memory_space<vmem>>, vector<12x512xf32>
      tpu.vector_store %arg6[%c0_14, %c0_15], %18 {strides = array<i32>} : memref<12x512xf32, #tpu.memory_space<vmem>>, vector<12x512xf32>,
    } else {
    }
    return
  }
  func.func @transform_0(%arg0: i32, %arg1: i32, %arg2: i32) -> (i32, i32) {
    %c0_i32 = arith.constant 0 : i32
    return %arg0, %arg2 : i32, i32
  }
  func.func @transform_1(%arg0: i32, %arg1: i32, %arg2: i32) -> (i32, i32) {
    %c0_i32 = arith.constant 0 : i32
    return %arg2, %arg1 : i32, i32
  }
  func.func @transform_2(%arg0: i32, %arg1: i32, %arg2: i32) -> (i32, i32) {
    %c0_i32 = arith.constant 0 : i32
    %c0_i32_0 = arith.constant 0 : i32
    return %arg0, %c0_i32 : i32, i32
  }
  func.func @transform_3(%arg0: i32, %arg1: i32, %arg2: i32) -> (i32, i32) {
    %c0_i32 = arith.constant 0 : i32
    return %arg0, %arg1 : i32, i32
  }
}

</mosaic_0001>

<llo_original>
// kernel: tile.0
$region0: #{tile.0}
  %s0 = inlined_call_operand.vmem [shape: f32[4,3], index: 0, kind: input, shape index: {}]
  %s1 = inlined_call_operand.vmem [shape: f32[12,1], index: 1, kind: output, shape index: {}]
  $region1: #{tile.0} parent=0
    #allocation0 [shape = 'u8[4096]{0}', space=vmem, size = 0x1000, scoped, tag = 'scoped mem for input reshape']
    %s3 = ssub.s32 16, 1
    %v4 = vld [vmem:[%s0] sm:%s3]
    %5 = vst [vmem:[#allocation0] sm:%s3] %v4
    %v6 = vld [vmem:[#allocation0] sm:$0xf]
    %vm7 = vcmask 7168
    %8 = vst.msk [vmem:[%s1] ss:$3 sm:$0xf] %vm7, %v6
    %v9 = vld [vmem:[#allocation0] sm:$0xf]
    %10 = vrot.lane.b32.xlu0 %v9, 127
    %v11 = vpop.permute.xlu0 %10
    %vm12 = vcmask 7168
    %s13 = scalar_lea.vmem %s1, 1
    %14 = vst.msk [vmem:[%s13] ss:$3 sm:$0xf] %vm12, %v11
    %v15 = vld [vmem:[#allocation0] sm:$0xf]
    %16 = vrot.lane.b32.xlu0 %v15, 126
    %v17 = vpop.permute.xlu0 %16
    %vm18 = vcmask 7168
    %s19 = scalar_lea.vmem %s1, 2
    %20 = vst.msk [vmem:[%s19] ss:$3 sm:$0xf] %vm18, %v17

// kernel: tile.8
$region0: #{tile.8}
  #allocation2 [shape = 's32[1]{0}', space=sflag, size = 0x4, scoped, tag = 'scoped memory for tile.8']
  %s0 = inlined_call_operand.hbm [shape: f32[3], index: 0, kind: input, shape index: {}]
  %s1 = inlined_call_operand.vmem [shape: f32[4,3], index: 1, kind: output, shape index: {}]
  $region1: #{tile.8} parent=0
    #allocation0 [shape = 'u8[512]{0}', space=vmem, size = 0x400, scoped, tag = 'operand span for operand 0']
    #allocation1 [shape = 's32[1]{0}', space=sflag, size = 0x4, scoped, tag = 'scoped memory for tile.8']
    %2 = vsyncpa [#allocation1], 0
    // Predicated region
    $region2: #{tile.8} parent=1 // pred_check
      _
    $region3: #{tile.8} parent=1 // pred_check_branch
      %4 = sbr.rel (0) target = $region5
    $region4: #{tile.8} parent=1 // pred_region
      %6 = vsyncadd [#allocation1], 0
      %s8 = sshll.u32 %s0, 4
      %s9 = int_to_ptr.hbm [resolvable:$true] %s8
      %s10 = sshll.u32 [#allocation0], 4
      %s11 = int_to_ptr.vmem [resolvable:$true] %s10
      %13 = dma.hbm_to_vmem [thread:$0]  %s9, 16, %s11, [#allocation1]
    $region5: #{tile.8} parent=1 // pred_fallthru
      _
    // Predicated region
    $region6: #{tile.8} parent=1 // pred_check
      _
    $region7: #{tile.8} parent=1 // pred_check_branch
      %15 = sbr.rel (0) target = $region9
    $region8: #{tile.8} parent=1 // pred_region
      %17 = dma.done [#allocation1], 16
    $region9: #{tile.8} parent=1 // pred_fallthru
      _
    %v18 = vld [vmem:[#allocation0] ss:$0 sm:$0xff]
    %19 = vst [vmem:[%s1] sm:$0xf] %v18
    %20 = vsyncpa [#allocation1], 1

// kernel: generator_forward.6
$region0: #{generator_forward.6}
  #allocation0 [shape = 'u32[]', space=smem, size = 0x4, offset = 0x4, fixed_abs, tag = 'smem constant byte address 0x4 - core index']
  #allocation1 [shape = 'u32[72,128]{1,0:T(1,128)}', space=vmem, size = 0x9000, scoped, tag = 'internal scratch']
  #allocation2 [shape = 'f32[2,512]{1,0:T(2,128)}', space=vmem, size = 0x1000, scoped, tag = 'scratch operand']
  %s0 = inlined_call_operand.hbm [shape: f32[2,32], index: 0, kind: input, shape index: {}]
  %s1 = inlined_call_operand.hbm [shape: f32[32,512], index: 1, kind: input, shape index: {}]
  %s2 = inlined_call_operand.hbm [shape: f32[1,512], index: 2, kind: input, shape index: {}]
  %s3 = inlined_call_operand.hbm [shape: f32[1,512], index: 3, kind: input, shape index: {}]
  %s4 = inlined_call_operand.vmem [shape: f32[2,512], index: 4, kind: output, shape index: {}]
  %s5 = sld [smem:[#allocation0]]
  $region50: #{generator_forward.6} parent=0
    _
  %s7 = ssub.s32 1, %s5
  %s8 = scalar_select 0, %s7, %s5
  $region1: #{generator_forward.6} parent=0
    #allocation3 [shape = 'u8[1024]{0}', space=vmem, size = 0x400, scoped, tag = 'input window, operand 0, single buffered']
    #allocation4 [shape = 's32[1]{0}', space=sflag, size = 0x4, scoped, tag = 'scoped memory for generator_forward.6']
    #allocation5 [shape = 'u8[65536]{0}', space=vmem, size = 0x10000, scoped, tag = 'input window, operand 1, single buffered']
    #allocation6 [shape = 's32[1]{0}', space=sflag, size = 0x4, scoped, tag = 'scoped memory for generator_forward.6']
    #allocation7 [shape = 'u8[2048]{0}', space=vmem, size = 0x800, scoped, tag = 'input window, operand 2, single buffered']
    #allocation8 [shape = 'u8[2048]{0}', space=vmem, size = 0x800, scoped, tag = 'input window, operand 3, single buffered']
    #allocation9 [shape = 's32[1]{0}', space=sflag, size = 0x4, scoped, tag = 'scoped memory for generator_forward.6']
    %9 = vsyncpa [#allocation4], 0
    %10 = vsyncpa [#allocation6], 0
    %11 = vsyncpa [#allocation9], 0
    // Predicated region
    $region2: #{generator_forward.6} parent=1 // pred_check
      _
    $region3: #{generator_forward.6} parent=1 // pred_check_branch
      %13 = sbr.rel (0) target = $region5
    $region4: #{generator_forward.6} parent=1 // pred_region
      %15 = vsyncadd [#allocation4], 0
      %s17 = sshll.u32 %s0, 4
      %s18 = int_to_ptr.hbm [resolvable:$true] %s17
      %s19 = sshll.u32 [#allocation3], 4
      %s20 = int_to_ptr.vmem [resolvable:$true] %s19
      %22 = dma.hbm_to_vmem [thread:$0]  %s18, 32, %s20, [#allocation4]
    $region5: #{generator_forward.6} parent=1 // pred_fallthru
      _
    // Predicated region
    $region6: #{generator_forward.6} parent=1 // pred_check
      _
    $region7: #{generator_forward.6} parent=1 // pred_check_branch
      %24 = sbr.rel (0) target = $region9
    $region8: #{generator_forward.6} parent=1 // pred_region
      %26 = vsyncadd [#allocation6], 0
      %s27 = sshll.u32 %s1, 4
      %s28 = int_to_ptr.hbm [resolvable:$true] %s27
      %s29 = sshll.u32 [#allocation5], 4
      %s30 = int_to_ptr.vmem [resolvable:$true] %s29
      %35 = dma.hbm_to_vmem [thread:$0]  %s28, 2048, %s30, [#allocation6], 512, 512, 32
    $region9: #{generator_forward.6} parent=1 // pred_fallthru
      _
    // Predicated region
    $region10: #{generator_forward.6} parent=1 // pred_check
      _
    $region11: #{generator_forward.6} parent=1 // pred_check_branch
      %37 = sbr.rel (0) target = $region13
    $region12: #{generator_forward.6} parent=1 // pred_region
      %39 = vsyncadd [#allocation6], 0
      %s41 = sshll.u32 %s2, 4
      %s42 = int_to_ptr.hbm [resolvable:$true] %s41
      %s43 = sshll.u32 [#allocation7], 4
      %s44 = int_to_ptr.vmem [resolvable:$true] %s43
      %46 = dma.hbm_to_vmem [thread:$0]  %s42, 64, %s44, [#allocation6]
    $region13: #{generator_forward.6} parent=1 // pred_fallthru
      _
    // Predicated region
    $region14: #{generator_forward.6} parent=1 // pred_check
      _
    $region15: #{generator_forward.6} parent=1 // pred_check_branch
      %48 = sbr.rel (0) target = $region17
    $region16: #{generator_forward.6} parent=1 // pred_region
      %50 = vsyncadd [#allocation9], 0
      %s52 = sshll.u32 %s3, 4
      %s53 = int_to_ptr.hbm [resolvable:$true] %s52
      %s54 = sshll.u32 [#allocation8], 4
      %s55 = int_to_ptr.vmem [resolvable:$true] %s54
      %57 = dma.hbm_to_vmem [thread:$0]  %s53, 64, %s55, [#allocation9]
    $region17: #{generator_forward.6} parent=1 // pred_fallthru
      _
    // Predicated region
    $region18: #{generator_forward.6} parent=1 // pred_check
      _
    $region19: #{generator_forward.6} parent=1 // pred_check_branch
      %59 = sbr.rel (0) target = $region21
    $region20: #{generator_forward.6} parent=1 // pred_region
      %61 = dma.done [#allocation4], 32
    $region21: #{generator_forward.6} parent=1 // pred_fallthru
      _
    // Predicated region
    $region22: #{generator_forward.6} parent=1 // pred_check
      _
    $region23: #{generator_forward.6} parent=1 // pred_check_branch
      %63 = sbr.rel (0) target = $region25
    $region24: #{generator_forward.6} parent=1 // pred_region
      %65 = dma.done [#allocation6], 2048
    $region25: #{generator_forward.6} parent=1 // pred_fallthru
      _
    // Predicated region
    $region26: #{generator_forward.6} parent=1 // pred_check
      _
    $region27: #{generator_forward.6} parent=1 // pred_check_branch
      %67 = sbr.rel (0) target = $region29
    $region28: #{generator_forward.6} parent=1 // pred_region
      %69 = dma.done [#allocation6], 64
    $region29: #{generator_forward.6} parent=1 // pred_fallthru
      _
    // Predicated region
    $region30: #{generator_forward.6} parent=1 // pred_check
      _
    $region31: #{generator_forward.6} parent=1 // pred_check_branch
      %71 = sbr.rel (0) target = $region33
    $region32: #{generator_forward.6} parent=1 // pred_region
      %73 = dma.done [#allocation9], 64
    $region33: #{generator_forward.6} parent=1 // pred_fallthru
      _
    %p75 = scmp.eq.s32.totalorder 0, 0
    // Predicated region
    $region34: #{generator_forward.6} parent=1 // pred_check
      %p76 = pneg %p75
    $region35: #{generator_forward.6} parent=1 // pred_check_branch
      %78 = sbr.rel (%p76) target = $region37
    $region36: #{generator_forward.6} parent=1 // pred_region
      %79 = vst [vmem:[#allocation2] sm:$0xff] 0.0
    $region37: #{generator_forward.6} parent=1 // pred_fallthru
      _
    %v80 = vld [vmem:[#allocation2] sm:$0xff]
    %v81 = vld [vmem:[#allocation3] sm:$0x3]
    %v82 = vpack.c.bf16 %v81, %v81
    %v83 = vld [vmem:[#allocation5] sm:$0xff]
    %v84 = vld [vmem:[#allocation5 + $0x8] sm:$0xff]
    %v85 = vld [vmem:[#allocation5 + $0x10] sm:$0xff]
    %v86 = vld [vmem:[#allocation5 + $0x18] sm:$0xff]
    %v87 = vld [vmem:[#allocation5 + $0x20] sm:$0xff]
    %v88 = vld [vmem:[#allocation5 + $0x28] sm:$0xff]
    %v89 = vld [vmem:[#allocation5 + $0x30] sm:$0xff]
    %v90 = vld [vmem:[#allocation5 + $0x38] sm:$0xff]
    %v91 = vld [vmem:[#allocation5 + $0x40] sm:$0xff]
    %v92 = vld [vmem:[#allocation5 + $0x48] sm:$0xff]
    %v93 = vld [vmem:[#allocation5 + $0x50] sm:$0xff]
    %v94 = vld [vmem:[#allocation5 + $0x58] sm:$0xff]
    %v95 = vld [vmem:[#allocation5 + $0x60] sm:$0xff]
    %v96 = vld [vmem:[#allocation5 + $0x68] sm:$0xff]
    %v97 = vld [vmem:[#allocation5 + $0x70] sm:$0xff]
    %v98 = vld [vmem:[#allocation5 + $0x78] sm:$0xff]
    %v99 = vpack.c.bf16 %v87, %v83
    %v100 = vpack.c.bf16 %v88, %v84
    %v101 = vpack.c.bf16 %v89, %v85
    %v102 = vpack.c.bf16 %v90, %v86
    %v103 = vpack.c.bf16 %v95, %v91
    %v104 = vpack.c.bf16 %v96, %v92
    %v105 = vpack.c.bf16 %v97, %v93
    %v106 = vpack.c.bf16 %v98, %v94
    %vm107 = vcmask 261120
    %v109 = vsel %vm107, %v82, 0
    %111 = vmatpush.bf16.msra.mxu0 0
    %112 = vmatpush.bf16.msra.mxu0 0
    %113 = vmatpush.bf16.msra.mxu0 0
    %114 = vmatpush.bf16.msra.mxu0 0
    %115 = vmatpush.bf16.msra.mxu0 0
    %116 = vmatpush.bf16.msra.mxu0 0
    %117 = vmatpush.bf16.msra.mxu0 %v103
    %118 = vmatpush.bf16.msra.mxu0 %v99
    %119 = vmatmul.bf16.gmra.mxu0 %v109
    %v120 = vpop.f32.mrf.mxu0
    %v121 = vadd.f32 0.0, %v120
    %v122 = vpop.f32.mrf.mxu0
    %123 = vdwg.mxu0
    %124 = vmatpush.bf16.msra.mxu0 0
    %125 = vmatpush.bf16.msra.mxu0 0
    %126 = vmatpush.bf16.msra.mxu0 0
    %127 = vmatpush.bf16.msra.mxu0 0
    %128 = vmatpush.bf16.msra.mxu0 0
    %129 = vmatpush.bf16.msra.mxu0 0
    %130 = vmatpush.bf16.msra.mxu0 %v104
    %131 = vmatpush.bf16.msra.mxu0 %v100
    %132 = vmatmul.bf16.gmra.mxu0 %v109
    %v133 = vpop.f32.mrf.mxu0
    %v134 = vadd.f32 0.0, %v133
    %v135 = vpop.f32.mrf.mxu0
    %136 = vdwg.mxu0
    %137 = vmatpush.bf16.msra.mxu0 0
    %138 = vmatpush.bf16.msra.mxu0 0
    %139 = vmatpush.bf16.msra.mxu0 0
    %140 = vmatpush.bf16.msra.mxu0 0
    %141 = vmatpush.bf16.msra.mxu0 0
    %142 = vmatpush.bf16.msra.mxu0 0
    %143 = vmatpush.bf16.msra.mxu0 %v105
    %144 = vmatpush.bf16.msra.mxu0 %v101
    %145 = vmatmul.bf16.gmra.mxu0 %v109
    %v146 = vpop.f32.mrf.mxu0
    %v147 = vadd.f32 0.0, %v146
    %v148 = vpop.f32.mrf.mxu0
    %149 = vdwg.mxu0
    %150 = vmatpush.bf16.msra.mxu0 0
    %151 = vmatpush.bf16.msra.mxu0 0
    %152 = vmatpush.bf16.msra.mxu0 0
    %153 = vmatpush.bf16.msra.mxu0 0
    %154 = vmatpush.bf16.msra.mxu0 0
    %155 = vmatpush.bf16.msra.mxu0 0
    %156 = vmatpush.bf16.msra.mxu0 %v106
    %157 = vmatpush.bf16.msra.mxu0 %v102
    %158 = vmatmul.bf16.gmra.mxu0 %v109
    %v159 = vpop.f32.mrf.mxu0
    %v160 = vadd.f32 0.0, %v159
    %v161 = vpop.f32.mrf.mxu0
    %162 = vdwg.mxu0
    %v167 = vrot.slane %v134, 6
    %v168 = vrot.slane %v147, 4
    %v169 = vrot.slane %v160, 2
    %vm170 = vcmask 1041408
    %v171 = vsel %vm170, %v121, %v167
    %vm172 = vcmask 1045508
    %v173 = vsel %vm172, %v168, %v169
    %vm174 = vcmask 1043456
    %v175 = vsel %vm174, %v171, %v173
    %v177 = vadd.f32 %v80, %v175
    %178 = vst [vmem:[#allocation2] sm:$0xff] %v177
    // Predicated region
    $region38: #{generator_forward.6} parent=1 // pred_check
      %p179 = pneg %p75
    $region39: #{generator_forward.6} parent=1 // pred_check_branch
      %181 = sbr.rel (%p179) target = $region41
    $region40: #{generator_forward.6} parent=1 // pred_region
      %v182 = vld [vmem:[#allocation2] sm:$0xff]
      %184 = vst [vmem:[#allocation1] ss:$4 sm:$0xff] %v182
      %v185 = vld.sshfl [vmem:[#allocation1] sm:$0xff pattern:$0x73625140]
      %v186 = vld.sshfl [vmem:[#allocation1 + $0x8] sm:$0xff pattern:$0x73625140]
      %v187 = vld.sshfl [vmem:[#allocation1 + $0x10] sm:$0xff pattern:$0x73625140]
      %v188 = vld.sshfl [vmem:[#allocation1 + $0x18] sm:$0xff pattern:$0x73625140]
      %v193 = vsel %vm170, %v185, 0.0
      %v194 = vrot.slane %v193, 4
      %v195 = vadd.f32 %v193, %v194
      %v196 = vrot.slane %v195, 2
      %v197 = vadd.f32 %v195, %v196
      %v198 = vrot.slane %v197, 1
      %v199 = vadd.f32 %v197, %v198
      %v200 = vsel %vm170, %v186, 0.0
      %v201 = vrot.slane %v200, 4
      %v202 = vadd.f32 %v200, %v201
      %v203 = vrot.slane %v202, 2
      %v204 = vadd.f32 %v202, %v203
      %v205 = vrot.slane %v204, 1
      %v206 = vadd.f32 %v204, %v205
      %v207 = vsel %vm170, %v187, 0.0
      %v208 = vrot.slane %v207, 4
      %v209 = vadd.f32 %v207, %v208
      %v210 = vrot.slane %v209, 2
      %v211 = vadd.f32 %v209, %v210
      %v212 = vrot.slane %v211, 1
      %v213 = vadd.f32 %v211, %v212
      %v214 = vsel %vm170, %v188, 0.0
      %v215 = vrot.slane %v214, 4
      %v216 = vadd.f32 %v214, %v215
      %v217 = vrot.slane %v216, 2
      %v218 = vadd.f32 %v216, %v217
      %v219 = vrot.slane %v218, 1
      %v220 = vadd.f32 %v218, %v219
      %v221 = vmul.f32 %v199, 0.5
      %v222 = vmul.f32 %v206, 0.5
      %v223 = vmul.f32 %v213, 0.5
      %v224 = vmul.f32 %v220, 0.5
      %v225 = vmul.f32 %v182, %v182
      %227 = vst [vmem:[#allocation1] ss:$4 sm:$0xff] %v225
      %v228 = vld.sshfl [vmem:[#allocation1] sm:$0xff pattern:$0x73625140]
      %v229 = vld.sshfl [vmem:[#allocation1 + $0x8] sm:$0xff pattern:$0x73625140]
      %v230 = vld.sshfl [vmem:[#allocation1 + $0x10] sm:$0xff pattern:$0x73625140]
      %v231 = vld.sshfl [vmem:[#allocation1 + $0x18] sm:$0xff pattern:$0x73625140]
      %v236 = vsel %vm170, %v228, 0.0
      %v237 = vrot.slane %v236, 4
      %v238 = vadd.f32 %v236, %v237
      %v239 = vrot.slane %v238, 2
      %v240 = vadd.f32 %v238, %v239
      %v241 = vrot.slane %v240, 1
      %v242 = vadd.f32 %v240, %v241
      %v243 = vsel %vm170, %v229, 0.0
      %v244 = vrot.slane %v243, 4
      %v245 = vadd.f32 %v243, %v244
      %v246 = vrot.slane %v245, 2
      %v247 = vadd.f32 %v245, %v246
      %v248 = vrot.slane %v247, 1
      %v249 = vadd.f32 %v247, %v248
      %v250 = vsel %vm170, %v230, 0.0
      %v251 = vrot.slane %v250, 4
      %v252 = vadd.f32 %v250, %v251
      %v253 = vrot.slane %v252, 2
      %v254 = vadd.f32 %v252, %v253
      %v255 = vrot.slane %v254, 1
      %v256 = vadd.f32 %v254, %v255
      %v257 = vsel %vm170, %v231, 0.0
      %v258 = vrot.slane %v257, 4
      %v259 = vadd.f32 %v257, %v258
      %v260 = vrot.slane %v259, 2
      %v261 = vadd.f32 %v259, %v260
      %v262 = vrot.slane %v261, 1
      %v263 = vadd.f32 %v261, %v262
      %v264 = vmul.f32 %v242, 0.5
      %v265 = vmul.f32 %v249, 0.5
      %v266 = vmul.f32 %v256, 0.5
      %v267 = vmul.f32 %v263, 0.5
      %v268 = vmul.f32 %v221, %v221
      %v269 = vmul.f32 %v222, %v222
      %v270 = vmul.f32 %v223, %v223
      %v271 = vmul.f32 %v224, %v224
      %v272 = vsub.f32 %v264, %v268
      %v273 = vsub.f32 %v265, %v269
      %v274 = vsub.f32 %v266, %v270
      %v275 = vsub.f32 %v267, %v271
      %v276 = vmax.f32 %v272, 0.0
      %v277 = vmax.f32 %v273, 0.0
      %v278 = vmax.f32 %v274, 0.0
      %v279 = vmax.f32 %v275, 0.0
      %v284 = vrot.slane %v222, 6
      %v285 = vrot.slane %v223, 4
      %v286 = vrot.slane %v224, 2
      %v287 = vsel %vm170, %v221, %v284
      %v288 = vsel %vm172, %v285, %v286
      %v289 = vsel %vm174, %v287, %v288
      %v291 = vsub.f32 %v182, %v289
      %v292 = vadd.f32 %v276, 1e-05
      %v293 = vadd.f32 %v277, 1e-05
      %v294 = vadd.f32 %v278, 1e-05
      %v295 = vadd.f32 %v279, 1e-05
      %v296 = vrsqrt.pop %v292
      %v297 = vmul.f32 %v296, %v292
      %v298 = vmul.f32 %v297, %v296
      %v299 = vmul.f32 0.5, %v298
      %v300 = vsub.f32 1.5, %v299
      %v301 = vmul.f32 %v296, %v300
      %vm302 = vweird.f32 %v292
      %vm303 = vweird.f32 %v296
      %vm304 = vmor %vm302, %vm303
      %v305 = vsel %vm304, %v296, %v301
      %v306 = vrsqrt.pop %v293
      %v307 = vmul.f32 %v306, %v293
      %v308 = vmul.f32 %v307, %v306
      %v309 = vmul.f32 0.5, %v308
      %v310 = vsub.f32 1.5, %v309
      %v311 = vmul.f32 %v306, %v310
      %vm312 = vweird.f32 %v293
      %vm313 = vweird.f32 %v306
      %vm314 = vmor %vm312, %vm313
      %v315 = vsel %vm314, %v306, %v311
      %v316 = vrsqrt.pop %v294
      %v317 = vmul.f32 %v316, %v294
      %v318 = vmul.f32 %v317, %v316
      %v319 = vmul.f32 0.5, %v318
      %v320 = vsub.f32 1.5, %v319
      %v321 = vmul.f32 %v316, %v320
      %vm322 = vweird.f32 %v294
      %vm323 = vweird.f32 %v316
      %vm324 = vmor %vm322, %vm323
      %v325 = vsel %vm324, %v316, %v321
      %v326 = vrsqrt.pop %v295
      %v327 = vmul.f32 %v326, %v295
      %v328 = vmul.f32 %v327, %v326
      %v329 = vmul.f32 0.5, %v328
      %v330 = vsub.f32 1.5, %v329
      %v331 = vmul.f32 %v326, %v330
      %vm332 = vweird.f32 %v295
      %vm333 = vweird.f32 %v326
      %vm334 = vmor %vm332, %vm333
      %v335 = vsel %vm334, %v326, %v331
      %v336 = vld [vmem:[#allocation7] sm:$0xf]
      %v338 = vperm.slane %v336, 0
      %v339 = vperm.slane %v336, 1
      %v340 = vperm.slane %v336, 2
      %v341 = vperm.slane %v336, 3
      %v346 = vmul.f32 %v305, %v338
      %v347 = vmul.f32 %v315, %v339
      %v348 = vmul.f32 %v325, %v340
      %v349 = vmul.f32 %v335, %v341
      %v350 = vperm.slane %v346, 0
      %v351 = vperm.slane %v347, 0
      %v352 = vperm.slane %v348, 0
      %v353 = vperm.slane %v349, 0
      %v358 = vrot.slane %v351, 6
      %v359 = vrot.slane %v352, 4
      %v360 = vrot.slane %v353, 2
      %v361 = vsel %vm170, %v350, %v358
      %v362 = vsel %vm172, %v359, %v360
      %v363 = vsel %vm174, %v361, %v362
      %v365 = vmul.f32 %v291, %v363
      %v366 = vld [vmem:[#allocation8] sm:$0xf]
      %v368 = vperm.slane %v366, 0
      %v369 = vperm.slane %v366, 1
      %v370 = vperm.slane %v366, 2
      %v371 = vperm.slane %v366, 3
      %v372 = vrot.slane %v369, 6
      %v373 = vrot.slane %v370, 4
      %v374 = vrot.slane %v371, 2
      %v375 = vsel %vm170, %v368, %v372
      %v376 = vsel %vm172, %v373, %v374
      %v377 = vsel %vm174, %v375, %v376
      %v379 = vadd.f32 %v365, %v377
      %v380 = vmax.f32 %v379, 0.0
      %381 = vst [vmem:[%s4] sm:$0xff] %v380
    $region41: #{generator_forward.6} parent=1 // pred_fallthru
      _
    // Predicated region
    $region42: #{generator_forward.6} parent=1 // pred_check
      _
    $region43: #{generator_forward.6} parent=1 // pred_check_branch
      %383 = sbr.rel (0) target = $region45
    $region44: #{generator_forward.6} parent=1 // pred_region
      _
    $region45: #{generator_forward.6} parent=1 // pred_fallthru
      _
    // Predicated region
    $region46: #{generator_forward.6} parent=1 // pred_check
      _
    $region47: #{generator_forward.6} parent=1 // pred_check_branch
      %385 = sbr.rel (0) target = $region49
    $region48: #{generator_forward.6} parent=1 // pred_region
      _
    $region49: #{generator_forward.6} parent=1 // pred_fallthru
      _
    %386 = vsyncpa [#allocation4], 1
    %387 = vsyncpa [#allocation6], 1
    %388 = vsyncpa [#allocation9], 1

// kernel: generator_forward.8
$region0: #{generator_forward.8}
  #allocation0 [shape = 'u32[]', space=smem, size = 0x4, offset = 0x4, fixed_abs, tag = 'smem constant byte address 0x4 - core index']
  #allocation1 [shape = 'u32[72,128]{1,0:T(1,128)}', space=vmem, size = 0x9000, scoped, tag = 'internal scratch']
  %s0 = inlined_call_operand.vmem [shape: f32[16,128], index: 0, kind: input, shape index: {}]
  %s1 = inlined_call_operand.vmem [shape: f32[16,1], index: 1, kind: input, shape index: {}]
  %s2 = inlined_call_operand.vmem [shape: f32[16,1], index: 2, kind: input, shape index: {}]
  %s3 = inlined_call_operand.vmem [shape: f32[16,128], index: 3, kind: output, shape index: {}]
  %s4 = sld [smem:[#allocation0]]
  $region22: #{generator_forward.8} parent=0
    _
  %s6 = ssub.s32 1, %s4
  %s7 = scalar_select 0, %s6, %s4
  // Predicated region
  $region2: #{generator_forward.8} parent=0 // pred_check
    _
  $region3: #{generator_forward.8} parent=0 // pred_check_branch
    %9 = sbr.rel (0) target = $region5
  $region4: #{generator_forward.8} parent=0 // pred_region
    _
  $region5: #{generator_forward.8} parent=0 // pred_fallthru
    _
  // Predicated region
  $region6: #{generator_forward.8} parent=0 // pred_check
    _
  $region7: #{generator_forward.8} parent=0 // pred_check_branch
    %11 = sbr.rel (0) target = $region9
  $region8: #{generator_forward.8} parent=0 // pred_region
    _
  $region9: #{generator_forward.8} parent=0 // pred_fallthru
    _
  // Predicated region
  $region10: #{generator_forward.8} parent=0 // pred_check
    _
  $region11: #{generator_forward.8} parent=0 // pred_check_branch
    %13 = sbr.rel (0) target = $region13
  $region12: #{generator_forward.8} parent=0 // pred_region
    _
  $region13: #{generator_forward.8} parent=0 // pred_fallthru
    _
  %v14 = vld [vmem:[%s0] sm:$0xff]
  %v15 = vld [vmem:[%s0 + $0x8] sm:$0xff]
  %16 = vadd.xlane.f32.xlu0 %v14
  %v17 = vpop.xlane.xlu0 %16
  %18 = vadd.xlane.f32.xlu0 %v15
  %v19 = vpop.xlane.xlu0 %18
  %v20 = vmul.f32 %v17, 0.0078125
  %v21 = vmul.f32 %v19, 0.0078125
  %v22 = vmul.f32 %v14, %v14
  %v23 = vmul.f32 %v15, %v15
  %24 = vadd.xlane.f32.xlu0 %v22
  %v25 = vpop.xlane.xlu0 %24
  %26 = vadd.xlane.f32.xlu0 %v23
  %v27 = vpop.xlane.xlu0 %26
  %v28 = vmul.f32 %v25, 0.0078125
  %v29 = vmul.f32 %v27, 0.0078125
  %v30 = vmul.f32 %v20, %v20
  %v31 = vmul.f32 %v21, %v21
  %v32 = vsub.f32 %v28, %v30
  %v33 = vsub.f32 %v29, %v31
  %v34 = vmax.f32 %v32, 0.0
  %v35 = vmax.f32 %v33, 0.0
  %v36 = vadd.f32 %v34, 1e-05
  %v37 = vadd.f32 %v35, 1e-05
  %v38 = vrsqrt.pop %v36
  %v39 = vmul.f32 %v38, %v36
  %v40 = vmul.f32 %v39, %v38
  %v41 = vmul.f32 0.5, %v40
  %v42 = vsub.f32 1.5, %v41
  %v43 = vmul.f32 %v38, %v42
  %vm44 = vweird.f32 %v36
  %vm45 = vweird.f32 %v38
  %vm46 = vmor %vm44, %vm45
  %v47 = vsel %vm46, %v38, %v43
  %v48 = vrsqrt.pop %v37
  %v49 = vmul.f32 %v48, %v37
  %v50 = vmul.f32 %v49, %v48
  %v51 = vmul.f32 0.5, %v50
  %v52 = vsub.f32 1.5, %v51
  %v53 = vmul.f32 %v48, %v52
  %vm54 = vweird.f32 %v37
  %vm55 = vweird.f32 %v48
  %vm56 = vmor %vm54, %vm55
  %v57 = vsel %vm56, %v48, %v53
  %v58 = vld [vmem:[%s1] sm:$0xff]
  %v59 = vld [vmem:[%s1 + $0x8] sm:$0xff]
  %v60 = vmul.f32 %v47, %v58
  %v61 = vmul.f32 %v57, %v59
  %v62 = vsub.f32 %v14, %v20
  %v63 = vsub.f32 %v15, %v21
  %65 = vset.pattern.permute.xlu0 0
  %66 = vperm.xlu0 %65, %v60
  %v67 = vpop.permute.xlu0 %66
  %70 = vset.pattern.permute.xlu0 0
  %71 = vperm.xlu0 %70, %v61
  %v72 = vpop.permute.xlu0 %71
  %v74 = vmul.f32 %v62, %v67
  %v75 = vmul.f32 %v63, %v72
  %v76 = vld [vmem:[%s2] sm:$0xff]
  %v77 = vld [vmem:[%s2 + $0x8] sm:$0xff]
  %79 = vset.pattern.permute.xlu0 0
  %80 = vperm.xlu0 %79, %v76
  %v81 = vpop.permute.xlu0 %80
  %84 = vset.pattern.permute.xlu0 0
  %85 = vperm.xlu0 %84, %v77
  %v86 = vpop.permute.xlu0 %85
  %v88 = vadd.f32 %v74, %v81
  %v89 = vadd.f32 %v75, %v86
  %v90 = vmax.f32 %v88, 0.0
  %v91 = vmax.f32 %v89, 0.0
  %92 = vst [vmem:[%s3] sm:$0xff] %v90
  %93 = vst [vmem:[%s3 + $0x8] sm:$0xff] %v91
  // Predicated region
  $region14: #{generator_forward.8} parent=0 // pred_check
    _
  $region15: #{generator_forward.8} parent=0 // pred_check_branch
    %95 = sbr.rel (0) target = $region17
  $region16: #{generator_forward.8} parent=0 // pred_region
    _
  $region17: #{generator_forward.8} parent=0 // pred_fallthru
    _
  // Predicated region
  $region18: #{generator_forward.8} parent=0 // pred_check
    _
  $region19: #{generator_forward.8} parent=0 // pred_check_branch
    %97 = sbr.rel (0) target = $region21
  $region20: #{generator_forward.8} parent=0 // pred_region
    _
  $region21: #{generator_forward.8} parent=0 // pred_fallthru
    _

// kernel: generator_forward.7
$region0: #{generator_forward.7}
  #allocation0 [shape = 'u32[]', space=smem, size = 0x4, offset = 0x4, fixed_abs, tag = 'smem constant byte address 0x4 - core index']
  #allocation1 [shape = 'u32[72,128]{1,0:T(1,128)}', space=vmem, size = 0x9000, scoped, tag = 'internal scratch']
  #allocation2 [shape = 'f32[64,32]{1,0:T(8,128)}', space=vmem, size = 0x8000, scoped, tag = 'scratch operand']
  %s0 = inlined_call_operand.vmem [shape: f32[64,288], index: 0, kind: input, shape index: {}]
  %s1 = inlined_call_operand.vmem [shape: f32[288,32], index: 1, kind: input, shape index: {}]
  %s2 = inlined_call_operand.vmem [shape: f32[64,32], index: 2, kind: output, shape index: {}]
  %s3 = sld [smem:[#allocation0]]
  $region26: #{generator_forward.7} parent=0
    _
  %s5 = ssub.s32 1, %s3
  %s6 = scalar_select 0, %s5, %s3
  // Predicated region
  $region2: #{generator_forward.7} parent=0 // pred_check
    _
  $region3: #{generator_forward.7} parent=0 // pred_check_branch
    %8 = sbr.rel (0) target = $region5
  $region4: #{generator_forward.7} parent=0 // pred_region
    _
  $region5: #{generator_forward.7} parent=0 // pred_fallthru
    _
  // Predicated region
  $region6: #{generator_forward.7} parent=0 // pred_check
    _
  $region7: #{generator_forward.7} parent=0 // pred_check_branch
    %10 = sbr.rel (0) target = $region9
  $region8: #{generator_forward.7} parent=0 // pred_region
    _
  $region9: #{generator_forward.7} parent=0 // pred_fallthru
    _
  %p12 = scmp.eq.s32.totalorder 0, 0
  // Predicated region
  $region10: #{generator_forward.7} parent=0 // pred_check
    %p13 = pneg %p12
  $region11: #{generator_forward.7} parent=0 // pred_check_branch
    %15 = sbr.rel (%p13) target = $region13
  $region12: #{generator_forward.7} parent=0 // pred_region
    %vm16 = vcmask 261120
    %17 = vst.msk [vmem:[#allocation2] sm:$0xff] %vm16, 0.0
    %18 = vst.msk [vmem:[#allocation2 + $0x8] sm:$0xff] %vm16, 0.0
    %19 = vst.msk [vmem:[#allocation2 + $0x10] sm:$0xff] %vm16, 0.0
    %20 = vst.msk [vmem:[#allocation2 + $0x18] sm:$0xff] %vm16, 0.0
    %21 = vst.msk [vmem:[#allocation2 + $0x20] sm:$0xff] %vm16, 0.0
    %22 = vst.msk [vmem:[#allocation2 + $0x28] sm:$0xff] %vm16, 0.0
    %23 = vst.msk [vmem:[#allocation2 + $0x30] sm:$0xff] %vm16, 0.0
    %24 = vst.msk [vmem:[#allocation2 + $0x38] sm:$0xff] %vm16, 0.0
  $region13: #{generator_forward.7} parent=0 // pred_fallthru
    _
  %v25 = vld [vmem:[#allocation2] sm:$0xff]
  %v26 = vld [vmem:[#allocation2 + $0x8] sm:$0xff]
  %v27 = vld [vmem:[#allocation2 + $0x10] sm:$0xff]
  %v28 = vld [vmem:[#allocation2 + $0x18] sm:$0xff]
  %v29 = vld [vmem:[#allocation2 + $0x20] sm:$0xff]
  %v30 = vld [vmem:[#allocation2 + $0x28] sm:$0xff]
  %v31 = vld [vmem:[#allocation2 + $0x30] sm:$0xff]
  %v32 = vld [vmem:[#allocation2 + $0x38] sm:$0xff]
  %v33 = vld [vmem:[%s0] sm:$0xff]
  %v34 = vld [vmem:[%s0 + $0x8] sm:$0xff]
  %v35 = vld [vmem:[%s0 + $0x10] sm:$0xff]
  %v36 = vld [vmem:[%s0 + $0x18] sm:$0xff]
  %v37 = vld [vmem:[%s0 + $0x20] sm:$0xff]
  %v38 = vld [vmem:[%s0 + $0x28] sm:$0xff]
  %v39 = vld [vmem:[%s0 + $0x30] sm:$0xff]
  %v40 = vld [vmem:[%s0 + $0x38] sm:$0xff]
  %v41 = vld [vmem:[%s0 + $0x40] sm:$0xff]
  %v42 = vld [vmem:[%s0 + $0x48] sm:$0xff]
  %v43 = vld [vmem:[%s0 + $0x50] sm:$0xff]
  %v44 = vld [vmem:[%s0 + $0x58] sm:$0xff]
  %v45 = vld [vmem:[%s0 + $0x60] sm:$0xff]
  %v46 = vld [vmem:[%s0 + $0x68] sm:$0xff]
  %v47 = vld [vmem:[%s0 + $0x70] sm:$0xff]
  %v48 = vld [vmem:[%s0 + $0x78] sm:$0xff]
  %v49 = vld [vmem:[%s0 + $0x80] sm:$0xff]
  %v50 = vld [vmem:[%s0 + $0x88] sm:$0xff]
  %v51 = vld [vmem:[%s0 + $0x90] sm:$0xff]
  %v52 = vld [vmem:[%s0 + $0x98] sm:$0xff]
  %v53 = vld [vmem:[%s0 + $0xa0] sm:$0xff]
  %v54 = vld [vmem:[%s0 + $0xa8] sm:$0xff]
  %v55 = vld [vmem:[%s0 + $0xb0] sm:$0xff]
  %v56 = vld [vmem:[%s0 + $0xb8] sm:$0xff]
  %v57 = vpack.c.bf16 %v36, %v33
  %v58 = vpack.c.bf16 %v37, %v34
  %v59 = vpack.c.bf16 %v38, %v35
  %v60 = vpack.c.bf16 %v42, %v39
  %v61 = vpack.c.bf16 %v43, %v40
  %v62 = vpack.c.bf16 %v44, %v41
  %v63 = vpack.c.bf16 %v48, %v45
  %v64 = vpack.c.bf16 %v49, %v46
  %v65 = vpack.c.bf16 %v50, %v47
  %v66 = vpack.c.bf16 %v54, %v51
  %v67 = vpack.c.bf16 %v55, %v52
  %v68 = vpack.c.bf16 %v56, %v53
  %v69 = vld [vmem:[%s1] sm:$0xff]
  %v70 = vld [vmem:[%s1 + $0x8] sm:$0xff]
  %v71 = vld [vmem:[%s1 + $0x10] sm:$0xff]
  %v72 = vld [vmem:[%s1 + $0x18] sm:$0xff]
  %v73 = vld [vmem:[%s1 + $0x20] sm:$0xff]
  %v74 = vld [vmem:[%s1 + $0x28] sm:$0xff]
  %v75 = vld [vmem:[%s1 + $0x30] sm:$0xff]
  %v76 = vld [vmem:[%s1 + $0x38] sm:$0xff]
  %v77 = vld [vmem:[%s1 + $0x40] sm:$0xff]
  %v78 = vld [vmem:[%s1 + $0x48] sm:$0xff]
  %v79 = vld [vmem:[%s1 + $0x50] sm:$0xff]
  %v80 = vld [vmem:[%s1 + $0x58] sm:$0xff]
  %v81 = vld [vmem:[%s1 + $0x60] sm:$0xff]
  %v82 = vld [vmem:[%s1 + $0x68] sm:$0xff]
  %v83 = vld [vmem:[%s1 + $0x70] sm:$0xff]
  %v84 = vld [vmem:[%s1 + $0x78] sm:$0xff]
  %v85 = vld [vmem:[%s1 + $0x80] sm:$0xff]
  %v86 = vld [vmem:[%s1 + $0x88] sm:$0xff]
  %v87 = vld [vmem:[%s1 + $0x90] sm:$0xff]
  %v88 = vld [vmem:[%s1 + $0x98] sm:$0xff]
  %v89 = vld [vmem:[%s1 + $0xa0] sm:$0xff]
  %v90 = vld [vmem:[%s1 + $0xa8] sm:$0xff]
  %v91 = vld [vmem:[%s1 + $0xb0] sm:$0xff]
  %v92 = vld [vmem:[%s1 + $0xb8] sm:$0xff]
  %v93 = vld [vmem:[%s1 + $0xc0] sm:$0xff]
  %v94 = vld [vmem:[%s1 + $0xc8] sm:$0xff]
  %v95 = vld [vmem:[%s1 + $0xd0] sm:$0xff]
  %v96 = vld [vmem:[%s1 + $0xd8] sm:$0xff]
  %v97 = vld [vmem:[%s1 + $0xe0] sm:$0xff]
  %v98 = vld [vmem:[%s1 + $0xe8] sm:$0xff]
  %v99 = vld [vmem:[%s1 + $0xf0] sm:$0xff]
  %v100 = vld [vmem:[%s1 + $0xf8] sm:$0xff]
  %v101 = vld [vmem:[%s1 + $0x100] sm:$0xff]
  %v102 = vld [vmem:[%s1 + $0x108] sm:$0xff]
  %v103 = vld [vmem:[%s1 + $0x110] sm:$0xff]
  %v104 = vld [vmem:[%s1 + $0x118] sm:$0xff]
  %v105 = vpack.c.bf16 %v70, %v69
  %v106 = vpack.c.bf16 %v72, %v71
  %v107 = vpack.c.bf16 %v74, %v73
  %v108 = vpack.c.bf16 %v76, %v75
  %v109 = vpack.c.bf16 %v78, %v77
  %v110 = vpack.c.bf16 %v80, %v79
  %v111 = vpack.c.bf16 %v82, %v81
  %v112 = vpack.c.bf16 %v84, %v83
  %v113 = vpack.c.bf16 %v86, %v85
  %v114 = vpack.c.bf16 %v88, %v87
  %v115 = vpack.c.bf16 %v90, %v89
  %v116 = vpack.c.bf16 %v92, %v91
  %v117 = vpack.c.bf16 %v94, %v93
  %v118 = vpack.c.bf16 %v96, %v95
  %v119 = vpack.c.bf16 %v98, %v97
  %v120 = vpack.c.bf16 %v100, %v99
  %v121 = vpack.c.bf16 %v102, %v101
  %v122 = vpack.c.bf16 %v104, %v103
  %vm123 = vcmask 261120
  %v125 = vsel %vm123, %v59, 0
  %v128 = vsel %vm123, %v62, 0
  %v131 = vsel %vm123, %v65, 0
  %v134 = vsel %vm123, %v68, 0
  %136 = vmatpush.bf16.msra.mxu0 %v112
  %137 = vmatpush.bf16.msra.mxu0 %v111
  %138 = vmatpush.bf16.msra.mxu0 %v110
  %139 = vmatpush.bf16.msra.mxu0 %v109
  %140 = vmatpush.bf16.msra.mxu0 %v108
  %141 = vmatpush.bf16.msra.mxu0 %v107
  %142 = vmatpush.bf16.msra.mxu0 %v106
  %143 = vmatpush.bf16.msra.mxu0 %v105
  %144 = vmatmul.bf16.gmra.mxu0 %v57
  %v145 = vpop.f32.mrf.mxu0
  %v146 = vadd.f32 0.0, %v145
  %v147 = vpop.f32.mrf.mxu0
  %v148 = vadd.f32 0.0, %v147
  %149 = vmatmul.bf16.gmra.mxu0 %v60
  %v150 = vpop.f32.mrf.mxu0
  %v151 = vadd.f32 0.0, %v150
  %v152 = vpop.f32.mrf.mxu0
  %v153 = vadd.f32 0.0, %v152
  %154 = vmatmul.bf16.gmra.mxu0 %v63
  %v155 = vpop.f32.mrf.mxu0
  %v156 = vadd.f32 0.0, %v155
  %v157 = vpop.f32.mrf.mxu0
  %v158 = vadd.f32 0.0, %v157
  %159 = vmatmul.bf16.gmra.mxu0 %v66
  %v160 = vpop.f32.mrf.mxu0
  %v161 = vadd.f32 0.0, %v160
  %v162 = vpop.f32.mrf.mxu0
  %v163 = vadd.f32 0.0, %v162
  %164 = vdwg.mxu0
  %165 = vmatpush.bf16.msra.mxu0 %v120
  %166 = vmatpush.bf16.msra.mxu0 %v119
  %167 = vmatpush.bf16.msra.mxu0 %v118
  %168 = vmatpush.bf16.msra.mxu0 %v117
  %169 = vmatpush.bf16.msra.mxu0 %v116
  %170 = vmatpush.bf16.msra.mxu0 %v115
  %171 = vmatpush.bf16.msra.mxu0 %v114
  %172 = vmatpush.bf16.msra.mxu0 %v113
  %173 = vmatmul.bf16.gmra.mxu0 %v58
  %v174 = vpop.f32.mrf.mxu0
  %v175 = vadd.f32 %v146, %v174
  %v176 = vpop.f32.mrf.mxu0
  %v177 = vadd.f32 %v148, %v176
  %178 = vmatmul.bf16.gmra.mxu0 %v61
  %v179 = vpop.f32.mrf.mxu0
  %v180 = vadd.f32 %v151, %v179
  %v181 = vpop.f32.mrf.mxu0
  %v182 = vadd.f32 %v153, %v181
  %183 = vmatmul.bf16.gmra.mxu0 %v64
  %v184 = vpop.f32.mrf.mxu0
  %v185 = vadd.f32 %v156, %v184
  %v186 = vpop.f32.mrf.mxu0
  %v187 = vadd.f32 %v158, %v186
  %188 = vmatmul.bf16.gmra.mxu0 %v67
  %v189 = vpop.f32.mrf.mxu0
  %v190 = vadd.f32 %v161, %v189
  %v191 = vpop.f32.mrf.mxu0
  %v192 = vadd.f32 %v163, %v191
  %193 = vdwg.mxu0
  %194 = vmatpush.bf16.msra.mxu0 0
  %195 = vmatpush.bf16.msra.mxu0 0
  %196 = vmatpush.bf16.msra.mxu0 0
  %197 = vmatpush.bf16.msra.mxu0 0
  %198 = vmatpush.bf16.msra.mxu0 0
  %199 = vmatpush.bf16.msra.mxu0 0
  %200 = vmatpush.bf16.msra.mxu0 %v122
  %201 = vmatpush.bf16.msra.mxu0 %v121
  %202 = vmatmul.bf16.gmra.mxu0 %v125
  %v203 = vpop.f32.mrf.mxu0
  %v204 = vadd.f32 %v175, %v203
  %v205 = vpop.f32.mrf.mxu0
  %v206 = vadd.f32 %v177, %v205
  %207 = vmatmul.bf16.gmra.mxu0 %v128
  %v208 = vpop.f32.mrf.mxu0
  %v209 = vadd.f32 %v180, %v208
  %v210 = vpop.f32.mrf.mxu0
  %v211 = vadd.f32 %v182, %v210
  %212 = vmatmul.bf16.gmra.mxu0 %v131
  %v213 = vpop.f32.mrf.mxu0
  %v214 = vadd.f32 %v185, %v213
  %v215 = vpop.f32.mrf.mxu0
  %v216 = vadd.f32 %v187, %v215
  %217 = vmatmul.bf16.gmra.mxu0 %v134
  %v218 = vpop.f32.mrf.mxu0
  %v219 = vadd.f32 %v190, %v218
  %v220 = vpop.f32.mrf.mxu0
  %v221 = vadd.f32 %v192, %v220
  %222 = vdwg.mxu0
  %v223 = vadd.f32 %v25, %v204
  %v224 = vadd.f32 %v26, %v206
  %v225 = vadd.f32 %v27, %v209
  %v226 = vadd.f32 %v28, %v211
  %v227 = vadd.f32 %v29, %v214
  %v228 = vadd.f32 %v30, %v216
  %v229 = vadd.f32 %v31, %v219
  %v230 = vadd.f32 %v32, %v221
  %231 = vst.msk [vmem:[#allocation2] sm:$0xff] %vm123, %v223
  %232 = vst.msk [vmem:[#allocation2 + $0x8] sm:$0xff] %vm123, %v224
  %233 = vst.msk [vmem:[#allocation2 + $0x10] sm:$0xff] %vm123, %v225
  %234 = vst.msk [vmem:[#allocation2 + $0x18] sm:$0xff] %vm123, %v226
  %235 = vst.msk [vmem:[#allocation2 + $0x20] sm:$0xff] %vm123, %v227
  %236 = vst.msk [vmem:[#allocation2 + $0x28] sm:$0xff] %vm123, %v228
  %237 = vst.msk [vmem:[#allocation2 + $0x30] sm:$0xff] %vm123, %v229
  %238 = vst.msk [vmem:[#allocation2 + $0x38] sm:$0xff] %vm123, %v230
  // Predicated region
  $region14: #{generator_forward.7} parent=0 // pred_check
    %p239 = pneg %p12
  $region15: #{generator_forward.7} parent=0 // pred_check_branch
    %241 = sbr.rel (%p239) target = $region17
  $region16: #{generator_forward.7} parent=0 // pred_region
    %v242 = vld [vmem:[#allocation2] sm:$0xff]
    %v243 = vld [vmem:[#allocation2 + $0x8] sm:$0xff]
    %v244 = vld [vmem:[#allocation2 + $0x10] sm:$0xff]
    %v245 = vld [vmem:[#allocation2 + $0x18] sm:$0xff]
    %v246 = vld [vmem:[#allocation2 + $0x20] sm:$0xff]
    %v247 = vld [vmem:[#allocation2 + $0x28] sm:$0xff]
    %v248 = vld [vmem:[#allocation2 + $0x30] sm:$0xff]
    %v249 = vld [vmem:[#allocation2 + $0x38] sm:$0xff]
    %250 = vst.msk [vmem:[%s2] sm:$0xff] %vm123, %v242
    %251 = vst.msk [vmem:[%s2 + $0x8] sm:$0xff] %vm123, %v243
    %252 = vst.msk [vmem:[%s2 + $0x10] sm:$0xff] %vm123, %v244
    %253 = vst.msk [vmem:[%s2 + $0x18] sm:$0xff] %vm123, %v245
    %254 = vst.msk [vmem:[%s2 + $0x20] sm:$0xff] %vm123, %v246
    %255 = vst.msk [vmem:[%s2 + $0x28] sm:$0xff] %vm123, %v247
    %256 = vst.msk [vmem:[%s2 + $0x30] sm:$0xff] %vm123, %v248
    %257 = vst.msk [vmem:[%s2 + $0x38] sm:$0xff] %vm123, %v249
  $region17: #{generator_forward.7} parent=0 // pred_fallthru
    _
  // Predicated region
  $region18: #{generator_forward.7} parent=0 // pred_check
    _
  $region19: #{generator_forward.7} parent=0 // pred_check_branch
    %259 = sbr.rel (0) target = $region21
  $region20: #{generator_forward.7} parent=0 // pred_region
    _
  $region21: #{generator_forward.7} parent=0 // pred_fallthru
    _
  // Predicated region
  $region22: #{generator_forward.7} parent=0 // pred_check
    _
  $region23: #{generator_forward.7} parent=0 // pred_check_branch
    %261 = sbr.rel (0) target = $region25
  $region24: #{generator_forward.7} parent=0 // pred_region
    _
  $region25: #{generator_forward.7} parent=0 // pred_fallthru
    _

// kernel: generator_forward.9
$region0: #{generator_forward.9}
  #allocation0 [shape = 'u32[]', space=smem, size = 0x4, offset = 0x4, fixed_abs, tag = 'smem constant byte address 0x4 - core index']
  #allocation1 [shape = 'u32[72,128]{1,0:T(1,128)}', space=vmem, size = 0x9000, scoped, tag = 'internal scratch']
  #allocation2 [shape = 'f32[32,128]{1,0:T(8,128)}', space=vmem, size = 0x4000, scoped, tag = 'scratch operand']
  %s0 = inlined_call_operand.vmem [shape: f32[32,144], index: 0, kind: input, shape index: {}]
  %s1 = inlined_call_operand.vmem [shape: f32[144,128], index: 1, kind: input, shape index: {}]
  %s2 = inlined_call_operand.vmem [shape: f32[32,128], index: 2, kind: output, shape index: {}]
  %s3 = sld [smem:[#allocation0]]
  $region26: #{generator_forward.9} parent=0
    _
  %s5 = ssub.s32 1, %s3
  %s6 = scalar_select 0, %s5, %s3
  // Predicated region
  $region2: #{generator_forward.9} parent=0 // pred_check
    _
  $region3: #{generator_forward.9} parent=0 // pred_check_branch
    %8 = sbr.rel (0) target = $region5
  $region4: #{generator_forward.9} parent=0 // pred_region
    _
  $region5: #{generator_forward.9} parent=0 // pred_fallthru
    _
  // Predicated region
  $region6: #{generator_forward.9} parent=0 // pred_check
    _
  $region7: #{generator_forward.9} parent=0 // pred_check_branch
    %10 = sbr.rel (0) target = $region9
  $region8: #{generator_forward.9} parent=0 // pred_region
    _
  $region9: #{generator_forward.9} parent=0 // pred_fallthru
    _
  %p12 = scmp.eq.s32.totalorder 0, 0
  // Predicated region
  $region10: #{generator_forward.9} parent=0 // pred_check
    %p13 = pneg %p12
  $region11: #{generator_forward.9} parent=0 // pred_check_branch
    %15 = sbr.rel (%p13) target = $region13
  $region12: #{generator_forward.9} parent=0 // pred_region
    %16 = vst [vmem:[#allocation2] sm:$0xff] 0.0
    %17 = vst [vmem:[#allocation2 + $0x8] sm:$0xff] 0.0
    %18 = vst [vmem:[#allocation2 + $0x10] sm:$0xff] 0.0
    %19 = vst [vmem:[#allocation2 + $0x18] sm:$0xff] 0.0
  $region13: #{generator_forward.9} parent=0 // pred_fallthru
    _
  %v20 = vld [vmem:[#allocation2] sm:$0xff]
  %v21 = vld [vmem:[#allocation2 + $0x8] sm:$0xff]
  %v22 = vld [vmem:[#allocation2 + $0x10] sm:$0xff]
  %v23 = vld [vmem:[#allocation2 + $0x18] sm:$0xff]
  %v24 = vld [vmem:[%s0] sm:$0xff]
  %v25 = vld [vmem:[%s0 + $0x8] sm:$0xff]
  %v26 = vld [vmem:[%s0 + $0x10] sm:$0xff]
  %v27 = vld [vmem:[%s0 + $0x18] sm:$0xff]
  %v28 = vld [vmem:[%s0 + $0x20] sm:$0xff]
  %v29 = vld [vmem:[%s0 + $0x28] sm:$0xff]
  %v30 = vld [vmem:[%s0 + $0x30] sm:$0xff]
  %v31 = vld [vmem:[%s0 + $0x38] sm:$0xff]
  %v32 = vpack.c.bf16 %v26, %v24
  %v33 = vpack.c.bf16 %v27, %v25
  %v34 = vpack.c.bf16 %v30, %v28
  %v35 = vpack.c.bf16 %v31, %v29
  %v36 = vld [vmem:[%s1] sm:$0xff]
  %v37 = vld [vmem:[%s1 + $0x8] sm:$0xff]
  %v38 = vld [vmem:[%s1 + $0x10] sm:$0xff]
  %v39 = vld [vmem:[%s1 + $0x18] sm:$0xff]
  %v40 = vld [vmem:[%s1 + $0x20] sm:$0xff]
  %v41 = vld [vmem:[%s1 + $0x28] sm:$0xff]
  %v42 = vld [vmem:[%s1 + $0x30] sm:$0xff]
  %v43 = vld [vmem:[%s1 + $0x38] sm:$0xff]
  %v44 = vld [vmem:[%s1 + $0x40] sm:$0xff]
  %v45 = vld [vmem:[%s1 + $0x48] sm:$0xff]
  %v46 = vld [vmem:[%s1 + $0x50] sm:$0xff]
  %v47 = vld [vmem:[%s1 + $0x58] sm:$0xff]
  %v48 = vld [vmem:[%s1 + $0x60] sm:$0xff]
  %v49 = vld [vmem:[%s1 + $0x68] sm:$0xff]
  %v50 = vld [vmem:[%s1 + $0x70] sm:$0xff]
  %v51 = vld [vmem:[%s1 + $0x78] sm:$0xff]
  %v52 = vld [vmem:[%s1 + $0x80] sm:$0xff]
  %v53 = vld [vmem:[%s1 + $0x88] sm:$0xff]
  %v54 = vpack.c.bf16 %v37, %v36
  %v55 = vpack.c.bf16 %v39, %v38
  %v56 = vpack.c.bf16 %v41, %v40
  %v57 = vpack.c.bf16 %v43, %v42
  %v58 = vpack.c.bf16 %v45, %v44
  %v59 = vpack.c.bf16 %v47, %v46
  %v60 = vpack.c.bf16 %v49, %v48
  %v61 = vpack.c.bf16 %v51, %v50
  %v62 = vpack.c.bf16 %v53, %v52
  %vm63 = vcmask 130048
  %v65 = vsel %vm63, %v33, 0
  %v68 = vsel %vm63, %v35, 0
  %70 = vmatpush.bf16.msra.mxu0 %v61
  %71 = vmatpush.bf16.msra.mxu0 %v60
  %72 = vmatpush.bf16.msra.mxu0 %v59
  %73 = vmatpush.bf16.msra.mxu0 %v58
  %74 = vmatpush.bf16.msra.mxu0 %v57
  %75 = vmatpush.bf16.msra.mxu0 %v56
  %76 = vmatpush.bf16.msra.mxu0 %v55
  %77 = vmatpush.bf16.msra.mxu0 %v54
  %78 = vmatmul.bf16.gmra.mxu0 %v32
  %v79 = vpop.f32.mrf.mxu0
  %v80 = vadd.f32 0.0, %v79
  %v81 = vpop.f32.mrf.mxu0
  %v82 = vadd.f32 0.0, %v81
  %83 = vmatmul.bf16.gmra.mxu0 %v34
  %v84 = vpop.f32.mrf.mxu0
  %v85 = vadd.f32 0.0, %v84
  %v86 = vpop.f32.mrf.mxu0
  %v87 = vadd.f32 0.0, %v86
  %88 = vdwg.mxu0
  %89 = vmatpush.bf16.msra.mxu0 0
  %90 = vmatpush.bf16.msra.mxu0 0
  %91 = vmatpush.bf16.msra.mxu0 0
  %92 = vmatpush.bf16.msra.mxu0 0
  %93 = vmatpush.bf16.msra.mxu0 0
  %94 = vmatpush.bf16.msra.mxu0 0
  %95 = vmatpush.bf16.msra.mxu0 0
  %96 = vmatpush.bf16.msra.mxu0 %v62
  %97 = vmatmul.bf16.gmra.mxu0 %v65
  %v98 = vpop.f32.mrf.mxu0
  %v99 = vadd.f32 %v80, %v98
  %v100 = vpop.f32.mrf.mxu0
  %v101 = vadd.f32 %v82, %v100
  %102 = vmatmul.bf16.gmra.mxu0 %v68
  %v103 = vpop.f32.mrf.mxu0
  %v104 = vadd.f32 %v85, %v103
  %v105 = vpop.f32.mrf.mxu0
  %v106 = vadd.f32 %v87, %v105
  %107 = vdwg.mxu0
  %v108 = vadd.f32 %v20, %v99
  %v109 = vadd.f32 %v21, %v101
  %v110 = vadd.f32 %v22, %v104
  %v111 = vadd.f32 %v23, %v106
  %112 = vst [vmem:[#allocation2] sm:$0xff] %v108
  %113 = vst [vmem:[#allocation2 + $0x8] sm:$0xff] %v109
  %114 = vst [vmem:[#allocation2 + $0x10] sm:$0xff] %v110
  %115 = vst [vmem:[#allocation2 + $0x18] sm:$0xff] %v111
  // Predicated region
  $region14: #{generator_forward.9} parent=0 // pred_check
    %p116 = pneg %p12
  $region15: #{generator_forward.9} parent=0 // pred_check_branch
    %118 = sbr.rel (%p116) target = $region17
  $region16: #{generator_forward.9} parent=0 // pred_region
    %v119 = vld [vmem:[#allocation2] sm:$0xff]
    %v120 = vld [vmem:[#allocation2 + $0x8] sm:$0xff]
    %v121 = vld [vmem:[#allocation2 + $0x10] sm:$0xff]
    %v122 = vld [vmem:[#allocation2 + $0x18] sm:$0xff]
    %123 = vst [vmem:[%s2] sm:$0xff] %v119
    %124 = vst [vmem:[%s2 + $0x8] sm:$0xff] %v120
    %125 = vst [vmem:[%s2 + $0x10] sm:$0xff] %v121
    %126 = vst [vmem:[%s2 + $0x18] sm:$0xff] %v122
  $region17: #{generator_forward.9} parent=0 // pred_fallthru
    _
  // Predicated region
  $region18: #{generator_forward.9} parent=0 // pred_check
    _
  $region19: #{generator_forward.9} parent=0 // pred_check_branch
    %128 = sbr.rel (0) target = $region21
  $region20: #{generator_forward.9} parent=0 // pred_region
    _
  $region21: #{generator_forward.9} parent=0 // pred_fallthru
    _
  // Predicated region
  $region22: #{generator_forward.9} parent=0 // pred_check
    _
  $region23: #{generator_forward.9} parent=0 // pred_check_branch
    %130 = sbr.rel (0) target = $region25
  $region24: #{generator_forward.9} parent=0 // pred_region
    _
  $region25: #{generator_forward.9} parent=0 // pred_fallthru
    _

// kernel: generator_forward.10
$region0: #{generator_forward.10}
  #allocation0 [shape = 'u32[]', space=smem, size = 0x4, offset = 0x4, fixed_abs, tag = 'smem constant byte address 0x4 - core index']
  #allocation1 [shape = 'u32[72,128]{1,0:T(1,128)}', space=vmem, size = 0x9000, scoped, tag = 'internal scratch']
  %s0 = inlined_call_operand.vmem [shape: f32[8,512], index: 0, kind: input, shape index: {}]
  %s1 = inlined_call_operand.vmem [shape: f32[8,1], index: 1, kind: input, shape index: {}]
  %s2 = inlined_call_operand.vmem [shape: f32[8,1], index: 2, kind: input, shape index: {}]
  %s3 = inlined_call_operand.vmem [shape: f32[8,512], index: 3, kind: output, shape index: {}]
  %s4 = sld [smem:[#allocation0]]
  $region22: #{generator_forward.10} parent=0
    _
  %s6 = ssub.s32 1, %s4
  %s7 = scalar_select 0, %s6, %s4
  // Predicated region
  $region2: #{generator_forward.10} parent=0 // pred_check
    _
  $region3: #{generator_forward.10} parent=0 // pred_check_branch
    %9 = sbr.rel (0) target = $region5
  $region4: #{generator_forward.10} parent=0 // pred_region
    _
  $region5: #{generator_forward.10} parent=0 // pred_fallthru
    _
  // Predicated region
  $region6: #{generator_forward.10} parent=0 // pred_check
    _
  $region7: #{generator_forward.10} parent=0 // pred_check_branch
    %11 = sbr.rel (0) target = $region9
  $region8: #{generator_forward.10} parent=0 // pred_region
    _
  $region9: #{generator_forward.10} parent=0 // pred_fallthru
    _
  // Predicated region
  $region10: #{generator_forward.10} parent=0 // pred_check
    _
  $region11: #{generator_forward.10} parent=0 // pred_check_branch
    %13 = sbr.rel (0) target = $region13
  $region12: #{generator_forward.10} parent=0 // pred_region
    _
  $region13: #{generator_forward.10} parent=0 // pred_fallthru
    _
  %v14 = vld [vmem:[%s0] sm:$0xff]
  %v15 = vld [vmem:[%s0 + $0x8] sm:$0xff]
  %v16 = vld [vmem:[%s0 + $0x10] sm:$0xff]
  %v17 = vld [vmem:[%s0 + $0x18] sm:$0xff]
  %v18 = vadd.f32 %v14, %v15
  %v19 = vadd.f32 %v18, %v16
  %v20 = vadd.f32 %v19, %v17
  %21 = vadd.xlane.f32.xlu0 %v20
  %v22 = vpop.xlane.xlu0 %21
  %v23 = vmul.f32 %v22, 0.001953125
  %v24 = vmul.f32 %v14, %v14
  %v25 = vmul.f32 %v15, %v15
  %v26 = vmul.f32 %v16, %v16
  %v27 = vmul.f32 %v17, %v17
  %v28 = vadd.f32 %v24, %v25
  %v29 = vadd.f32 %v28, %v26
  %v30 = vadd.f32 %v29, %v27
  %31 = vadd.xlane.f32.xlu0 %v30
  %v32 = vpop.xlane.xlu0 %31
  %v33 = vmul.f32 %v32, 0.001953125
  %v34 = vmul.f32 %v23, %v23
  %v35 = vsub.f32 %v33, %v34
  %v36 = vmax.f32 %v35, 0.0
  %v37 = vadd.f32 %v36, 1e-05
  %v38 = vrsqrt.pop %v37
  %v39 = vmul.f32 %v38, %v37
  %v40 = vmul.f32 %v39, %v38
  %v41 = vmul.f32 0.5, %v40
  %v42 = vsub.f32 1.5, %v41
  %v43 = vmul.f32 %v38, %v42
  %vm44 = vweird.f32 %v37
  %vm45 = vweird.f32 %v38
  %vm46 = vmor %vm44, %vm45
  %v47 = vsel %vm46, %v38, %v43
  %v48 = vld [vmem:[%s1] sm:$0xff]
  %v49 = vmul.f32 %v47, %v48
  %v50 = vsub.f32 %v14, %v23
  %v51 = vsub.f32 %v15, %v23
  %v52 = vsub.f32 %v16, %v23
  %v53 = vsub.f32 %v17, %v23
  %55 = vset.pattern.permute.xlu0 0
  %56 = vperm.xlu0 %55, %v49
  %v57 = vpop.permute.xlu0 %56
  %v59 = vmul.f32 %v50, %v57
  %v60 = vmul.f32 %v51, %v57
  %v61 = vmul.f32 %v52, %v57
  %v62 = vmul.f32 %v53, %v57
  %v63 = vld [vmem:[%s2] sm:$0xff]
  %65 = vset.pattern.permute.xlu0 0
  %66 = vperm.xlu0 %65, %v63
  %v67 = vpop.permute.xlu0 %66
  %v69 = vadd.f32 %v59, %v67
  %v70 = vadd.f32 %v60, %v67
  %v71 = vadd.f32 %v61, %v67
  %v72 = vadd.f32 %v62, %v67
  %v73 = vmax.f32 %v69, 0.0
  %v74 = vmax.f32 %v70, 0.0
  %v75 = vmax.f32 %v71, 0.0
  %v76 = vmax.f32 %v72, 0.0
  %77 = vst [vmem:[%s3] sm:$0xff] %v73
  %78 = vst [vmem:[%s3 + $0x8] sm:$0xff] %v74
  %79 = vst [vmem:[%s3 + $0x10] sm:$0xff] %v75
  %80 = vst [vmem:[%s3 + $0x18] sm:$0xff] %v76
  // Predicated region
  $region14: #{generator_forward.10} parent=0 // pred_check
    _
  $region15: #{generator_forward.10} parent=0 // pred_check_branch
    %82 = sbr.rel (0) target = $region17
  $region16: #{generator_forward.10} parent=0 // pred_region
    _
  $region17: #{generator_forward.10} parent=0 // pred_fallthru
    _
  // Predicated region
  $region18: #{generator_forward.10} parent=0 // pred_check
    _
  $region19: #{generator_forward.10} parent=0 // pred_check_branch
    %84 = sbr.rel (0) target = $region21
  $region20: #{generator_forward.10} parent=0 // pred_region
    _
  $region21: #{generator_forward.10} parent=0 // pred_fallthru
    _

// kernel: generator_forward.11
$region0: #{generator_forward.11}
  #allocation0 [shape = 'u32[]', space=smem, size = 0x4, offset = 0x4, fixed_abs, tag = 'smem constant byte address 0x4 - core index']
  #allocation1 [shape = 'u32[72,128]{1,0:T(1,128)}', space=vmem, size = 0x9000, scoped, tag = 'internal scratch']
  #allocation2 [shape = 'f32[12,512]{1,0:T(8,128)}', space=vmem, size = 0x8000, scoped, tag = 'scratch operand']
  %s0 = inlined_call_operand.vmem [shape: f32[12,72], index: 0, kind: input, shape index: {}]
  %s1 = inlined_call_operand.vmem [shape: f32[72,512], index: 1, kind: input, shape index: {}]
  %s2 = inlined_call_operand.vmem [shape: f32[12,1], index: 2, kind: input, shape index: {}]
  %s3 = inlined_call_operand.vmem [shape: f32[12,512], index: 3, kind: output, shape index: {}]
  %s4 = sld [smem:[#allocation0]]
  $region30: #{generator_forward.11} parent=0
    _
  %s6 = ssub.s32 1, %s4
  %s7 = scalar_select 0, %s6, %s4
  // Predicated region
  $region2: #{generator_forward.11} parent=0 // pred_check
    _
  $region3: #{generator_forward.11} parent=0 // pred_check_branch
    %9 = sbr.rel (0) target = $region5
  $region4: #{generator_forward.11} parent=0 // pred_region
    _
  $region5: #{generator_forward.11} parent=0 // pred_fallthru
    _
  // Predicated region
  $region6: #{generator_forward.11} parent=0 // pred_check
    _
  $region7: #{generator_forward.11} parent=0 // pred_check_branch
    %11 = sbr.rel (0) target = $region9
  $region8: #{generator_forward.11} parent=0 // pred_region
    _
  $region9: #{generator_forward.11} parent=0 // pred_fallthru
    _
  // Predicated region
  $region10: #{generator_forward.11} parent=0 // pred_check
    _
  $region11: #{generator_forward.11} parent=0 // pred_check_branch
    %13 = sbr.rel (0) target = $region13
  $region12: #{generator_forward.11} parent=0 // pred_region
    _
  $region13: #{generator_forward.11} parent=0 // pred_fallthru
    _
  %p15 = scmp.eq.s32.totalorder 0, 0
  // Predicated region
  $region14: #{generator_forward.11} parent=0 // pred_check
    %p16 = pneg %p15
  $region15: #{generator_forward.11} parent=0 // pred_check_branch
    %18 = sbr.rel (%p16) target = $region17
  $region16: #{generator_forward.11} parent=0 // pred_region
    %19 = vst [vmem:[#allocation2] sm:$0xff] 0.0
    %20 = vst [vmem:[#allocation2 + $0x8] sm:$0xff] 0.0
    %21 = vst [vmem:[#allocation2 + $0x10] sm:$0xff] 0.0
    %22 = vst [vmem:[#allocation2 + $0x18] sm:$0xff] 0.0
    %23 = vst [vmem:[#allocation2 + $0x20] sm:$0xf] 0.0
    %24 = vst [vmem:[#allocation2 + $0x28] sm:$0xf] 0.0
    %25 = vst [vmem:[#allocation2 + $0x30] sm:$0xf] 0.0
    %26 = vst [vmem:[#allocation2 + $0x38] sm:$0xf] 0.0
  $region17: #{generator_forward.11} parent=0 // pred_fallthru
    _
  %v27 = vld [vmem:[#allocation2] sm:$0xff]
  %v28 = vld [vmem:[#allocation2 + $0x8] sm:$0xff]
  %v29 = vld [vmem:[#allocation2 + $0x10] sm:$0xff]
  %v30 = vld [vmem:[#allocation2 + $0x18] sm:$0xff]
  %v31 = vld [vmem:[#allocation2 + $0x20] sm:$0xf]
  %v32 = vld [vmem:[#allocation2 + $0x28] sm:$0xf]
  %v33 = vld [vmem:[#allocation2 + $0x30] sm:$0xf]
  %v34 = vld [vmem:[#allocation2 + $0x38] sm:$0xf]
  %v35 = vld [vmem:[%s0] sm:$0xff]
  %v36 = vld [vmem:[%s0 + $0x8] sm:$0xf]
  %v37 = vpack.c.bf16 %v36, %v35
  %v38 = vld [vmem:[%s1] sm:$0xff]
  %v39 = vld [vmem:[%s1 + $0x8] sm:$0xff]
  %v40 = vld [vmem:[%s1 + $0x10] sm:$0xff]
  %v41 = vld [vmem:[%s1 + $0x18] sm:$0xff]
  %v42 = vld [vmem:[%s1 + $0x20] sm:$0xff]
  %v43 = vld [vmem:[%s1 + $0x28] sm:$0xff]
  %v44 = vld [vmem:[%s1 + $0x30] sm:$0xff]
  %v45 = vld [vmem:[%s1 + $0x38] sm:$0xff]
  %v46 = vld [vmem:[%s1 + $0x40] sm:$0xff]
  %v47 = vld [vmem:[%s1 + $0x48] sm:$0xff]
  %v48 = vld [vmem:[%s1 + $0x50] sm:$0xff]
  %v49 = vld [vmem:[%s1 + $0x58] sm:$0xff]
  %v50 = vld [vmem:[%s1 + $0x60] sm:$0xff]
  %v51 = vld [vmem:[%s1 + $0x68] sm:$0xff]
  %v52 = vld [vmem:[%s1 + $0x70] sm:$0xff]
  %v53 = vld [vmem:[%s1 + $0x78] sm:$0xff]
  %v54 = vld [vmem:[%s1 + $0x80] sm:$0xff]
  %v55 = vld [vmem:[%s1 + $0x88] sm:$0xff]
  %v56 = vld [vmem:[%s1 + $0x90] sm:$0xff]
  %v57 = vld [vmem:[%s1 + $0x98] sm:$0xff]
  %v58 = vld [vmem:[%s1 + $0xa0] sm:$0xff]
  %v59 = vld [vmem:[%s1 + $0xa8] sm:$0xff]
  %v60 = vld [vmem:[%s1 + $0xb0] sm:$0xff]
  %v61 = vld [vmem:[%s1 + $0xb8] sm:$0xff]
  %v62 = vld [vmem:[%s1 + $0xc0] sm:$0xff]
  %v63 = vld [vmem:[%s1 + $0xc8] sm:$0xff]
  %v64 = vld [vmem:[%s1 + $0xd0] sm:$0xff]
  %v65 = vld [vmem:[%s1 + $0xd8] sm:$0xff]
  %v66 = vld [vmem:[%s1 + $0xe0] sm:$0xff]
  %v67 = vld [vmem:[%s1 + $0xe8] sm:$0xff]
  %v68 = vld [vmem:[%s1 + $0xf0] sm:$0xff]
  %v69 = vld [vmem:[%s1 + $0xf8] sm:$0xff]
  %v70 = vld [vmem:[%s1 + $0x100] sm:$0xff]
  %v71 = vld [vmem:[%s1 + $0x108] sm:$0xff]
  %v72 = vld [vmem:[%s1 + $0x110] sm:$0xff]
  %v73 = vld [vmem:[%s1 + $0x118] sm:$0xff]
  %v74 = vpack.c.bf16 %v42, %v38
  %v75 = vpack.c.bf16 %v43, %v39
  %v76 = vpack.c.bf16 %v44, %v40
  %v77 = vpack.c.bf16 %v45, %v41
  %v78 = vpack.c.bf16 %v50, %v46
  %v79 = vpack.c.bf16 %v51, %v47
  %v80 = vpack.c.bf16 %v52, %v48
  %v81 = vpack.c.bf16 %v53, %v49
  %v82 = vpack.c.bf16 %v58, %v54
  %v83 = vpack.c.bf16 %v59, %v55
  %v84 = vpack.c.bf16 %v60, %v56
  %v85 = vpack.c.bf16 %v61, %v57
  %v86 = vpack.c.bf16 %v66, %v62
  %v87 = vpack.c.bf16 %v67, %v63
  %v88 = vpack.c.bf16 %v68, %v64
  %v89 = vpack.c.bf16 %v69, %v65
  %v90 = vpack.c.bf16 %v70, %v70
  %v91 = vpack.c.bf16 %v71, %v71
  %v92 = vpack.c.bf16 %v72, %v72
  %v93 = vpack.c.bf16 %v73, %v73
  %vm94 = vcmask 588800
  %v96 = vsel %vm94, %v37, 0
  %vm98 = vcmask 1043456
  %v100 = vsel %vm98, %v90, 0
  %v103 = vsel %vm98, %v91, 0
  %v106 = vsel %vm98, %v92, 0
  %v109 = vsel %vm98, %v93, 0
  %111 = vmatpush.bf16.msra.mxu0 0
  %112 = vmatpush.bf16.msra.mxu0 0
  %113 = vmatpush.bf16.msra.mxu0 0
  %114 = vmatpush.bf16.msra.mxu0 %v100
  %115 = vmatpush.bf16.msra.mxu0 %v86
  %116 = vmatpush.bf16.msra.mxu0 %v82
  %117 = vmatpush.bf16.msra.mxu0 %v78
  %118 = vmatpush.bf16.msra.mxu0 %v74
  %119 = vmatmul.bf16.gmra.mxu0 %v96
  %v120 = vpop.f32.mrf.mxu0
  %v121 = vadd.f32 0.0, %v120
  %v122 = vpop.f32.mrf.mxu0
  %v123 = vadd.f32 0.0, %v122
  %124 = vdwg.mxu0
  %125 = vmatpush.bf16.msra.mxu0 0
  %126 = vmatpush.bf16.msra.mxu0 0
  %127 = vmatpush.bf16.msra.mxu0 0
  %128 = vmatpush.bf16.msra.mxu0 %v103
  %129 = vmatpush.bf16.msra.mxu0 %v87
  %130 = vmatpush.bf16.msra.mxu0 %v83
  %131 = vmatpush.bf16.msra.mxu0 %v79
  %132 = vmatpush.bf16.msra.mxu0 %v75
  %133 = vmatmul.bf16.gmra.mxu0 %v96
  %v134 = vpop.f32.mrf.mxu0
  %v135 = vadd.f32 0.0, %v134
  %v136 = vpop.f32.mrf.mxu0
  %v137 = vadd.f32 0.0, %v136
  %138 = vdwg.mxu0
  %139 = vmatpush.bf16.msra.mxu0 0
  %140 = vmatpush.bf16.msra.mxu0 0
  %141 = vmatpush.bf16.msra.mxu0 0
  %142 = vmatpush.bf16.msra.mxu0 %v106
  %143 = vmatpush.bf16.msra.mxu0 %v88
  %144 = vmatpush.bf16.msra.mxu0 %v84
  %145 = vmatpush.bf16.msra.mxu0 %v80
  %146 = vmatpush.bf16.msra.mxu0 %v76
  %147 = vmatmul.bf16.gmra.mxu0 %v96
  %v148 = vpop.f32.mrf.mxu0
  %v149 = vadd.f32 0.0, %v148
  %v150 = vpop.f32.mrf.mxu0
  %v151 = vadd.f32 0.0, %v150
  %152 = vdwg.mxu0
  %153 = vmatpush.bf16.msra.mxu0 0
  %154 = vmatpush.bf16.msra.mxu0 0
  %155 = vmatpush.bf16.msra.mxu0 0
  %156 = vmatpush.bf16.msra.mxu0 %v109
  %157 = vmatpush.bf16.msra.mxu0 %v89
  %158 = vmatpush.bf16.msra.mxu0 %v85
  %159 = vmatpush.bf16.msra.mxu0 %v81
  %160 = vmatpush.bf16.msra.mxu0 %v77
  %161 = vmatmul.bf16.gmra.mxu0 %v96
  %v162 = vpop.f32.mrf.mxu0
  %v163 = vadd.f32 0.0, %v162
  %v164 = vpop.f32.mrf.mxu0
  %v165 = vadd.f32 0.0, %v164
  %166 = vdwg.mxu0
  %v167 = vadd.f32 %v27, %v121
  %v168 = vadd.f32 %v28, %v135
  %v169 = vadd.f32 %v29, %v149
  %v170 = vadd.f32 %v30, %v163
  %v171 = vadd.f32 %v31, %v123
  %v172 = vadd.f32 %v32, %v137
  %v173 = vadd.f32 %v33, %v151
  %v174 = vadd.f32 %v34, %v165
  %175 = vst [vmem:[#allocation2] sm:$0xff] %v167
  %176 = vst [vmem:[#allocation2 + $0x8] sm:$0xff] %v168
  %177 = vst [vmem:[#allocation2 + $0x10] sm:$0xff] %v169
  %178 = vst [vmem:[#allocation2 + $0x18] sm:$0xff] %v170
  %179 = vst [vmem:[#allocation2 + $0x20] sm:$0xf] %v171
  %180 = vst [vmem:[#allocation2 + $0x28] sm:$0xf] %v172
  %181 = vst [vmem:[#allocation2 + $0x30] sm:$0xf] %v173
  %182 = vst [vmem:[#allocation2 + $0x38] sm:$0xf] %v174
  // Predicated region
  $region18: #{generator_forward.11} parent=0 // pred_check
    %p183 = pneg %p15
  $region19: #{generator_forward.11} parent=0 // pred_check_branch
    %185 = sbr.rel (%p183) target = $region21
  $region20: #{generator_forward.11} parent=0 // pred_region
    %v186 = vld [vmem:[#allocation2] sm:$0xff]
    %v187 = vld [vmem:[#allocation2 + $0x8] sm:$0xff]
    %v188 = vld [vmem:[#allocation2 + $0x10] sm:$0xff]
    %v189 = vld [vmem:[#allocation2 + $0x18] sm:$0xff]
    %v190 = vld [vmem:[#allocation2 + $0x20] sm:$0xf]
    %v191 = vld [vmem:[#allocation2 + $0x28] sm:$0xf]
    %v192 = vld [vmem:[#allocation2 + $0x30] sm:$0xf]
    %v193 = vld [vmem:[#allocation2 + $0x38] sm:$0xf]
    %v194 = vld [vmem:[%s2] sm:$0xff]
    %v195 = vld [vmem:[%s2 + $0x8] sm:$0xf]
    %197 = vset.pattern.permute.xlu0 0
    %198 = vperm.xlu0 %197, %v194
    %v199 = vpop.permute.xlu0 %198
    %202 = vset.pattern.permute.xlu0 0
    %203 = vperm.xlu0 %202, %v195
    %v204 = vpop.permute.xlu0 %203
    %v206 = vadd.f32 %v186, %v199
    %v207 = vadd.f32 %v187, %v199
    %v208 = vadd.f32 %v188, %v199
    %v209 = vadd.f32 %v189, %v199
    %v210 = vadd.f32 %v190, %v204
    %v211 = vadd.f32 %v191, %v204
    %v212 = vadd.f32 %v192, %v204
    %v213 = vadd.f32 %v193, %v204
    %v214 = vtanh.pop %v206
    %v215 = vtanh.pop %v207
    %v216 = vtanh.pop %v208
    %v217 = vtanh.pop %v209
    %v218 = vtanh.pop %v210
    %v219 = vtanh.pop %v211
    %v220 = vtanh.pop %v212
    %v221 = vtanh.pop %v213
    %222 = vst [vmem:[%s3] sm:$0xff] %v214
    %223 = vst [vmem:[%s3 + $0x8] sm:$0xff] %v215
    %224 = vst [vmem:[%s3 + $0x10] sm:$0xff] %v216
    %225 = vst [vmem:[%s3 + $0x18] sm:$0xff] %v217
    %226 = vst [vmem:[%s3 + $0x20] sm:$0xf] %v218
    %227 = vst [vmem:[%s3 + $0x28] sm:$0xf] %v219
    %228 = vst [vmem:[%s3 + $0x30] sm:$0xf] %v220
    %229 = vst [vmem:[%s3 + $0x38] sm:$0xf] %v221
  $region21: #{generator_forward.11} parent=0 // pred_fallthru
    _
  // Predicated region
  $region22: #{generator_forward.11} parent=0 // pred_check
    _
  $region23: #{generator_forward.11} parent=0 // pred_check_branch
    %231 = sbr.rel (0) target = $region25
  $region24: #{generator_forward.11} parent=0 // pred_region
    _
  $region25: #{generator_forward.11} parent=0 // pred_fallthru
    _
  // Predicated region
  $region26: #{generator_forward.11} parent=0 // pred_check
    _
  $region27: #{generator_forward.11} parent=0 // pred_check_branch
    %233 = sbr.rel (0) target = $region29
  $region28: #{generator_forward.11} parent=0 // pred_region
    _
  $region29: #{generator_forward.11} parent=0 // pred_fallthru
    _

</llo_original>
